<compile_context>
chip_gen: v7x
topology: tpu7x:2x2x1
jax: 0.10.0
libtpu: 0.0.40
codegen_flags: <defaults>
</compile_context>

<pallas_src>
import math

import numpy as np
import jax
import jax.numpy as jnp
from jax.experimental import pallas as pl
from jax.experimental.pallas import tpu as pltpu

# ---------------- configuration (small synthetic sizes) ----------------
N_SAMPLES = 128          # module-level constant in humannerf.py
TOTAL_BONES = 24

CFG = dict(
    mweight_volume=dict(embedding_size=16, volume_size=8),
    non_rigid_motion_mlp=dict(condition_code_size=69, mlp_width=32, mlp_depth=4,
                              skips=[2], multires=6, i_embed=0,
                              kick_in_iter=0, full_band_iter=0),
    canonical_mlp=dict(mlp_depth=8, mlp_width=32, multires=6, i_embed=0),
    pose_decoder=dict(embedding_size=69, mlp_width=32, mlp_depth=2, kick_in_iter=0),
    nerf=dict(chunk=4096, netchunk_per_gpu=1 << 16, perturb=0.0),
)

NR_MULTIRES = CFG['non_rigid_motion_mlp']['multires']
CNL_MULTIRES = CFG['canonical_mlp']['multires']
assert NR_MULTIRES == CNL_MULTIRES        # shared freq/phase rows in the aux slab
EMB_DIM = 3 * 2 * NR_MULTIRES             # 36
NR_EMBED = 3 + EMB_DIM                    # 39
CNL_EMBED = 3 + EMB_DIM                   # 39
COND = CFG['non_rigid_motion_mlp']['condition_code_size']   # 69 = (24-1)*3
WN = CFG['non_rigid_motion_mlp']['mlp_width']
WC = CFG['canonical_mlp']['mlp_width']
CNL_DEPTH = CFG['canonical_mlp']['mlp_depth']
CNL_SKIP = 4                              # skips=[4] hard-coded in Network.__init__

POINT_TILE = 1024                         # points per Pallas grid step
PACK_W = 32                               # packed point input lanes: [bw(24)|xyz(3)|pad(5)]


# ---------------- packed parameter layouts ----------------
def _weight_layout():
    entries = [('Wn0e', NR_EMBED, WN), ('Wn1', WN, WN), ('Wn2h', WN, WN),
               ('Wn2e', NR_EMBED, WN), ('Wn3', WN, WN), ('Wno', WN, 3),
               ('V0', CNL_EMBED, WC)]
    for i in range(1, CNL_DEPTH):
        if i == CNL_SKIP:
            entries += [(f'V{i}h', WC, WC), (f'V{i}e', CNL_EMBED, WC)]
        else:
            entries += [(f'V{i}', WC, WC)]
    entries += [('Vo', WC, 4)]
    layout, off = {}, 0
    for name, k, n in entries:
        layout[name] = (off, k, n)
        off += ((k + 15) // 16) * 16      # 16-row alignment for bf16 (16,128) tiling
    return layout, off


W_LAYOUT, W_ROWS = _weight_layout()       # 16 weights, 576 rows total

_BIAS_SPECS = ([('bn0', WN), ('bn1', WN), ('bn2', WN), ('bn3', WN), ('bno', 3)]
               + [(f'c{i}', WC) for i in range(CNL_DEPTH)] + [('co', 4)])
B_LAYOUT = {name: (row, width) for row, (name, width) in enumerate(_BIAS_SPECS)}
ROW_FREQ = len(_BIAS_SPECS)               # 14
ROW_PHASE = ROW_FREQ + 1                  # 15
B_ROWS = 16

_POSENC_FREQ = np.repeat(2.0 ** np.arange(NR_MULTIRES), 6).astype(np.float32)        # (36,)
_POSENC_PHASE = np.tile(np.array([0., 0., 0., np.pi / 2, np.pi / 2, np.pi / 2],
                                 np.float32), NR_MULTIRES)                            # (36,)


# ---------------- Pallas kernels ----------------
def _bone_coord_kernel(pts_ref, a_ref, t_ref, out_ref):
    """Grid coordinates of every bone-transformed point: (TILE,128) dense slab.
    a[d, c*NB+i] = R_i[c,d] * s_c ; t[0, c*NB+i] = (T_i[c] - bbox_min_c) * s_c
    (s_c folds bbox normalization and the align_corners grid-coordinate affine)."""
    pts = pts_ref[...]                                    # (TILE, 3)
    a = a_ref[...]                                        # (3, 128)
    out_ref[...] = (pts[:, 0:1] * a[0:1, :] + pts[:, 1:2] * a[1:2, :]
                    + pts[:, 2:3] * a[2:3, :] + t_ref[...])


def bone_coords(pts_pad, acoef, tcoef):
    p_pad = pts_pad.shape[0]
    return pl.pallas_call(
        _bone_coord_kernel,
        grid=(p_pad // POINT_TILE,),
        in_specs=[pl.BlockSpec((POINT_TILE, 3), lambda i: (i, 0)),
                  pl.BlockSpec((3, 128), lambda i: (0, 0)),
                  pl.BlockSpec((1, 128), lambda i: (0, 0))],
        out_specs=pl.BlockSpec((POINT_TILE, 128), lambda i: (i, 0)),
        out_shape=jax.ShapeDtypeStruct((p_pad, 128), jnp.float32),
        compiler_params=pltpu.CompilerParams(dimension_semantics=("parallel",)),
    )(pts_pad, acoef, tcoef)


def _fused_point_kernel(pbw_ref, rt_ref, w_ref, b_ref, out_ref):
    pbw = pbw_ref[...]                                    # (TILE, 32) f32
    bw = pbw[:, 0:TOTAL_BONES]                            # (TILE, 24)
    pts = pbw[:, TOTAL_BONES:TOTAL_BONES + 3]             # (TILE, 3)

    # ---- _sample_motion_fields weighted sum (via linearity of the bone transform) ----
    wsum = jnp.sum(bw, axis=-1, keepdims=True)            # (TILE, 1)
    wrt = jnp.dot(bw, rt_ref[...], preferred_element_type=jnp.float32)   # (TILE, 12)
    inv = 1.0 / jnp.maximum(wsum, 1e-4)
    xs = []
    for c in range(3):
        v = (wrt[:, 3 * c:3 * c + 1] * pts[:, 0:1]
             + wrt[:, 3 * c + 1:3 * c + 2] * pts[:, 1:2]
             + wrt[:, 3 * c + 2:3 * c + 3] * pts[:, 2:3]
             + wrt[:, 9 + c:10 + c])
        xs.append(v)
    x_skel = jnp.concatenate(xs, axis=-1) * inv           # (TILE, 3)

    freq = b_ref[pl.ds(ROW_FREQ, 1), pl.ds(0, EMB_DIM)]   # (1, 36)
    phase = b_ref[pl.ds(ROW_PHASE, 1), pl.ds(0, EMB_DIM)]

    def posenc(x3):                                       # fused sin/cos embedder
        xb = jnp.concatenate([x3] * (2 * NR_MULTIRES), axis=-1)          # (TILE, 36)
        return jnp.concatenate([x3, jnp.sin(xb * freq + phase)], axis=-1)  # (TILE, 39)

    def dotw(x, name):                                    # bf16 matmul, f32 accumulation
        off, k, n = W_LAYOUT[name]
        w = w_ref[pl.ds(off, k), pl.ds(0, n)]
        return jnp.dot(x.astype(jnp.bfloat16), w, preferred_element_type=jnp.float32)

    def bias(name):
        row, width = B_LAYOUT[name]
        return b_ref[pl.ds(row, 1), pl.ds(0, width)]

    relu = jax.nn.relu

    # ---- NonRigidMotionMLP (condition-code contribution folded into bias row 0) ----
    nr_e = posenc(x_skel)
    h = relu(dotw(nr_e, 'Wn0e') + bias('bn0'))
    h = relu(dotw(h, 'Wn1') + bias('bn1'))
    h = relu(dotw(h, 'Wn2h') + dotw(nr_e, 'Wn2e') + bias('bn2'))          # skip layer
    h = relu(dotw(h, 'Wn3') + bias('bn3'))
    xyz = x_skel + dotw(h, 'Wno') + bias('bno')           # warped canonical position

    # ---- CanonicalMLP ----
    c_e = posenc(xyz)
    h = relu(dotw(c_e, 'V0') + bias('c0'))
    for i in range(1, CNL_DEPTH):
        if i == CNL_SKIP:
            h = relu(dotw(h, f'V{i}h') + dotw(c_e, f'V{i}e') + bias(f'c{i}'))
        else:
            h = relu(dotw(h, f'V{i}') + bias(f'c{i}'))
    raw = dotw(h, 'Vo') + bias('co')                      # (TILE, 4) raw rgb+sigma

    # single packed output slab: [r, g, b, sigma, wsum, wsum, wsum, wsum]
    out_ref[...] = jnp.concatenate([raw, jnp.broadcast_to(wsum, raw.shape)], axis=-1)


def fused_point_mlp(packed, rt, wslab, baux):
    p_pad = packed.shape[0]
    return pl.pallas_call(
        _fused_point_kernel,
        grid=(p_pad // POINT_TILE,),
        in_specs=[pl.BlockSpec((POINT_TILE, PACK_W), lambda i: (i, 0)),
                  pl.BlockSpec(rt.shape, lambda i: (0, 0)),
                  pl.BlockSpec(wslab.shape, lambda i: (0, 0)),
                  pl.BlockSpec(baux.shape, lambda i: (0, 0))],
        out_specs=pl.BlockSpec((POINT_TILE, 8), lambda i: (i, 0)),
        out_shape=jax.ShapeDtypeStruct((p_pad, 8), jnp.float32),
        compiler_params=pltpu.CompilerParams(dimension_semantics=("parallel",),
                                             vmem_limit_bytes=32 * 1024 * 1024),
    )(packed, rt, wslab, baux)


def _render_kernel(planes_ref, z_ref, dists_ref, tri_ref, bg_ref, out_ref):
    pr = planes_ref[...]                                  # (8, RT, S)
    z = z_ref[...]                                        # (RT, S)
    dists = dists_ref[...]                                # (RT, S)
    sigma, mask = pr[3], pr[4]
    alpha = (1.0 - jnp.exp(-jax.nn.relu(sigma) * dists)) * mask
    # exclusive cumprod of (1 - alpha + 1e-10) as log-space triangular matmul
    logv = jnp.log(1.0 - alpha + 1e-10)
    trans = jnp.exp(jnp.dot(logv, tri_ref[...], preferred_element_type=jnp.float32))
    weights = alpha * trans
    acc = jnp.sum(weights, axis=-1, keepdims=True)
    depth = jnp.sum(weights * z, axis=-1, keepdims=True)
    cols = [jnp.sum(weights * jax.nn.sigmoid(pr[c]), axis=-1, keepdims=True)
            for c in range(3)]
    rgb = jnp.concatenate(cols, axis=-1) + (1.0 - acc) * bg_ref[...] / 255.0
    out_ref[...] = jnp.concatenate([rgb, acc, depth, acc, acc, acc], axis=-1)


def raw2outputs(planes, z_vals, dists, bgcolor):
    n_rays, n_samp = z_vals.shape
    ray_tile = next((t for t in (256, 128, 64, 32, 16, 8) if n_rays % t == 0), None)
    assert ray_tile is not None, "n_rays must be a multiple of 8"
    tri = jnp.triu(jnp.ones((n_samp, n_samp), jnp.float32), k=1)   # tri[k, j] = (k < j)
    return pl.pallas_call(
        _render_kernel,
        grid=(n_rays // ray_tile,),
        in_specs=[pl.BlockSpec((8, ray_tile, n_samp), lambda i: (0, i, 0)),
                  pl.BlockSpec((ray_tile, n_samp), lambda i: (i, 0)),
                  pl.BlockSpec((ray_tile, n_samp), lambda i: (i, 0)),
                  pl.BlockSpec((n_samp, n_samp), lambda i: (0, 0)),
                  pl.BlockSpec((1, 3), lambda i: (0, 0))],
        out_specs=pl.BlockSpec((ray_tile, 8), lambda i: (i, 0)),
        out_shape=jax.ShapeDtypeStruct((n_rays, 8), jnp.float32),
        compiler_params=pltpu.CompilerParams(dimension_semantics=("parallel",),
                                             vmem_limit_bytes=32 * 1024 * 1024),
    )(planes, z_vals, dists, tri, bgcolor.reshape(1, 3))


# ---------------- plain JAX glue (small setup compute) ----------------
def rodrigues(rvec):
    theta = jnp.sqrt(jnp.sum(rvec ** 2, axis=-1, keepdims=True) + 1e-12)
    axis = rvec / theta
    ct = jnp.cos(theta)[..., None]
    st = jnp.sin(theta)[..., None]
    ax, ay, az = axis[..., 0], axis[..., 1], axis[..., 2]
    zeros = jnp.zeros_like(ax)
    K = jnp.stack([jnp.stack([zeros, -az, ay], -1),
                   jnp.stack([az, zeros, -ax], -1),
                   jnp.stack([-ay, ax, zeros], -1)], -2)
    outer = axis[..., :, None] * axis[..., None, :]
    eye = jnp.eye(3, dtype=rvec.dtype)
    return ct * eye + (1.0 - ct) * outer + st * K


def pose_decoder_fwd(p, posevec):
    """BodyPoseRefiner: tiny MLP -> 23 axis-angle residuals -> rotation matrices."""
    h = jax.nn.relu(posevec @ p['P_W0'] + p['P_b0'])
    h = jax.nn.relu(h @ p['P_W1'] + p['P_b1'])
    rvecs = (h @ p['P_Wo'] + p['P_bo']).reshape(-1, 3)    # (23, 3)
    return {'Rs': rodrigues(rvecs)[None, ...]}            # (1, 23, 3, 3); no 'Ts'


def motion_basis_computer(dst_Rs, dst_Ts, cnl_gtfms):
    b, nb = dst_Rs.shape[:2]
    G = jnp.zeros((b, nb, 4, 4), jnp.float32)
    G = G.at[:, :, :3, :3].set(dst_Rs)
    G = G.at[:, :, :3, 3].set(dst_Ts)
    G = G.at[:, :, 3, 3].set(1.0)
    f = jnp.matmul(G, jnp.linalg.inv(cnl_gtfms))
    return f[:, :, :3, :3], f[:, :, :3, 3]


def mweight_vol_decoder_fwd(p, motion_weights_priors):
    # TODO(synk): the real MotionWeightVolumeDecoder uses a ConvTranspose3d stack
    # (ConvDecoder3D); replaced by a deterministic linear decode of the constant embedding.
    vs = CFG['mweight_volume']['volume_size']
    decoded = (p['const_embedding'] @ p['Vd_W'] + p['Vd_b']).reshape(
        1, TOTAL_BONES + 1, vs, vs, vs)
    return jax.nn.softmax(decoded + jnp.log(motion_weights_priors), axis=1)


def trilinear_sample(vol, xg, yg, zg):
    """F.grid_sample (trilinear, padding_mode='zeros', align_corners=True), vectorized
    over bones.  vol: (NB, D, H, W); xg/yg/zg: (P, NB) continuous grid coords."""
    # TODO(synk): data-dependent gather kept in plain JAX (no clean Pallas gather on TPU).
    nb, D, H, W = vol.shape
    bone = jnp.arange(nb)[None, :]
    x0, y0, z0 = jnp.floor(xg), jnp.floor(yg), jnp.floor(zg)
    out = jnp.zeros(xg.shape, vol.dtype)
    for dz in (0, 1):
        for dy in (0, 1):
            for dx in (0, 1):
                xi, yi, zi = x0 + dx, y0 + dy, z0 + dz
                w = ((1.0 - jnp.abs(xg - xi)) * (1.0 - jnp.abs(yg - yi))
                     * (1.0 - jnp.abs(zg - zi)))
                valid = ((xi >= 0) & (xi <= W - 1) & (yi >= 0) & (yi <= H - 1)
                         & (zi >= 0) & (zi <= D - 1))
                xc = jnp.clip(xi, 0, W - 1).astype(jnp.int32)
                yc = jnp.clip(yi, 0, H - 1).astype(jnp.int32)
                zc = jnp.clip(zi, 0, D - 1).astype(jnp.int32)
                out = out + jnp.where(valid, vol[bone, zc, yc, xc] * w, 0.0)
    return out                                             # (P, NB)


def pack_param_slabs(params, cond):
    """One bf16 weight slab + one f32 bias/aux slab (cond folded into the layer-0 bias)."""
    w = jnp.zeros((W_ROWS, 128), jnp.bfloat16)
    for name, (off, k, n) in W_LAYOUT.items():
        w = w.at[off:off + k, :n].set(params[name].astype(jnp.bfloat16))
    b = jnp.zeros((B_ROWS, 128), jnp.float32)
    b0_eff = cond @ params['Wn0c'] + params['bn0']         # (1, WN)
    b = b.at[0, :WN].set(b0_eff[0])
    for name, (row, width) in B_LAYOUT.items():
        if name == 'bn0':
            continue
        b = b.at[row, :width].set(params[name][0])
    b = b.at[ROW_FREQ, :EMB_DIM].set(jnp.asarray(_POSENC_FREQ))
    b = b.at[ROW_PHASE, :EMB_DIM].set(jnp.asarray(_POSENC_PHASE))
    return w, b


def _pad_rows(x, multiple):
    pad = (-x.shape[0]) % multiple
    if pad:
        x = jnp.concatenate([x, jnp.zeros((pad,) + x.shape[1:], x.dtype)], axis=0)
    return x


# ---------------- Network.forward ----------------
def humannerf_forward(params, rays, dst_Rs, dst_Ts, cnl_gtfms, motion_weights_priors,
                      dst_posevec, near, far, cnl_bbox_min_xyz, cnl_bbox_scale_xyz,
                      bgcolor, iter_val=1e7):
    dst_Rs = dst_Rs[None]
    dst_Ts = dst_Ts[None]
    dst_posevec = dst_posevec[None]
    cnl_gtfms = cnl_gtfms[None]
    motion_weights_priors = motion_weights_priors[None]

    # ---- pose refinement (iter_val >= kick_in_iter) ----
    if iter_val >= CFG['pose_decoder']['kick_in_iter']:
        refined_Rs = pose_decoder_fwd(params, dst_posevec)['Rs']          # (1, 23, 3, 3)
        corrected = jnp.matmul(dst_Rs[:, 1:].reshape(-1, 3, 3),
                               refined_Rs.reshape(-1, 3, 3)).reshape(1, TOTAL_BONES - 1, 3, 3)
        dst_Rs = jnp.concatenate([dst_Rs[:, 0:1], corrected], axis=1)
        # refined_Ts is None for this pose decoder -> dst_Ts unchanged

    # ---- non-rigid condition code ----
    if iter_val < CFG['non_rigid_motion_mlp']['kick_in_iter']:
        non_rigid_mlp_input = jnp.zeros_like(dst_posevec)
    else:
        non_rigid_mlp_input = dst_posevec                                  # (1, COND)

    # ---- motion basis + motion-weight volume ----
    motion_scale_Rs, motion_Ts = motion_basis_computer(dst_Rs, dst_Ts, cnl_gtfms)
    motion_scale_Rs, motion_Ts = motion_scale_Rs[0], motion_Ts[0]          # (NB,3,3), (NB,3)
    motion_weights_vol = mweight_vol_decoder_fwd(params, motion_weights_priors)[0]  # (NB+1,V,V,V)

    # ---- rays and samples along rays (perturb == 0 -> no stratified sampling) ----
    rays_o, rays_d = rays
    rays_shape = rays_d.shape
    rays_o = rays_o.reshape(-1, 3).astype(jnp.float32)
    rays_d = rays_d.reshape(-1, 3).astype(jnp.float32)
    n_rays = rays_o.shape[0]
    t_vals = jnp.linspace(0.0, 1.0, N_SAMPLES, dtype=jnp.float32)
    z_vals = near * (1.0 - t_vals) + far * t_vals                          # (n_rays, S)
    pts = rays_o[:, None, :] + rays_d[:, None, :] * z_vals[:, :, None]     # (n_rays, S, 3)
    pts_flat = pts.reshape(-1, 3)
    n_pts = pts_flat.shape[0]

    # ---- motion fields: Pallas bone/grid-coord kernel + JAX trilinear gather ----
    V = CFG['mweight_volume']['volume_size']
    s = cnl_bbox_scale_xyz * (V - 1) / 2.0                                 # folds norm + grid affine
    A0 = motion_scale_Rs * s[None, :, None]                                # (NB,3,3)
    acoef = jnp.zeros((3, 128), jnp.float32).at[:, :3 * TOTAL_BONES].set(
        jnp.transpose(A0, (2, 1, 0)).reshape(3, 3 * TOTAL_BONES))
    T0 = (motion_Ts - cnl_bbox_min_xyz[None, :]) * s[None, :]              # (NB,3)
    tcoef = jnp.zeros((1, 128), jnp.float32).at[:, :3 * TOTAL_BONES].set(
        jnp.transpose(T0, (1, 0)).reshape(1, 3 * TOTAL_BONES))

    pts_pad = _pad_rows(pts_flat, POINT_TILE)
    g = bone_coords(pts_pad, acoef, tcoef)[:n_pts]                         # (P, 128) dense
    xg = g[:, 0:TOTAL_BONES]
    yg = g[:, TOTAL_BONES:2 * TOTAL_BONES]
    zg = g[:, 2 * TOTAL_BONES:3 * TOTAL_BONES]
    bw = trilinear_sample(motion_weights_vol[:-1], xg, yg, zg)             # (P, NB)

    # ---- fused per-point MLPs (Pallas) ----
    packed = jnp.concatenate(
        [bw, pts_flat, jnp.zeros((n_pts, PACK_W - TOTAL_BONES - 3), jnp.float32)], axis=-1)
    packed = _pad_rows(packed, POINT_TILE)
    rt = jnp.concatenate([motion_scale_Rs.reshape(TOTAL_BONES, 9), motion_Ts], axis=-1)
    wslab, baux = pack_param_slabs(params, non_rigid_mlp_input)
    raw8 = fused_point_mlp(packed, rt, wslab, baux)[:n_pts]                # (P, 8)
    planes = jnp.transpose(raw8.reshape(n_rays, N_SAMPLES, 8), (2, 0, 1))  # (8, n_rays, S)

    # ---- volume rendering (Pallas) ----
    dnorm = jnp.linalg.norm(rays_d, axis=-1, keepdims=True)
    dists = jnp.concatenate(
        [z_vals[:, 1:] - z_vals[:, :-1], jnp.full((n_rays, 1), 1e10, jnp.float32)],
        axis=-1) * dnorm
    rend = raw2outputs(planes, z_vals, dists, bgcolor)                     # (n_rays, 8)
    rgb_map, acc_map, depth_map = rend[:, 0:3], rend[:, 3], rend[:, 4]

    return {
        'rgb': rgb_map.reshape(rays_shape[:-1] + (3,)),
        'alpha': acc_map.reshape(rays_shape[:-1]),
        'depth': depth_map.reshape(rays_shape[:-1]),
    }


# ---------------- deterministic parameter init ----------------
def init_params(seed=0):
    base = jax.random.PRNGKey(seed)
    counter = [0]

    def draw(shape, scale):
        counter[0] += 1
        k = jax.random.fold_in(base, counter[0])
        return (scale * jax.random.normal(k, shape)).astype(jnp.float32)

    params = {}
    for name, (off, k, n) in W_LAYOUT.items():
        params[name] = draw((k, n), 1.0 / math.sqrt(k))
    params['Wn0c'] = draw((COND, WN), 1.0 / math.sqrt(COND))
    for name, (row, width) in B_LAYOUT.items():
        params[name] = draw((1, width), 0.02)
    # BodyPoseRefiner (tiny output init -> near-identity corrections, like HumanNeRF)
    pw = CFG['pose_decoder']['mlp_width']
    params['P_W0'] = draw((COND, pw), 1.0 / math.sqrt(COND))
    params['P_b0'] = draw((1, pw), 0.02)
    params['P_W1'] = draw((pw, pw), 1.0 / math.sqrt(pw))
    params['P_b1'] = draw((1, pw), 0.02)
    params['P_Wo'] = draw((pw, (TOTAL_BONES - 1) * 3), 1e-3)
    params['P_bo'] = draw((1, (TOTAL_BONES - 1) * 3), 1e-3)
    # MotionWeightVolumeDecoder surrogate
    emb = CFG['mweight_volume']['embedding_size']
    vs = CFG['mweight_volume']['volume_size']
    nvox = (TOTAL_BONES + 1) * vs ** 3
    params['const_embedding'] = draw((emb,), 1.0)
    params['Vd_W'] = draw((emb, nvox), 1.0 / math.sqrt(emb))
    params['Vd_b'] = draw((nvox,), 0.02)
    return params


if __name__ == "__main__":
    key = jax.random.PRNGKey(0)
    ks = jax.random.split(key, 10)
    H = W = 4
    n_rays = H * W

    rays_o = 0.1 * jax.random.normal(ks[0], (H, W, 3), jnp.float32)
    rays_d = jax.random.normal(ks[1], (H, W, 3), jnp.float32)
    rays_d = rays_d / jnp.linalg.norm(rays_d, axis=-1, keepdims=True)
    near = jnp.full((n_rays, 1), 1.0, jnp.float32)
    far = jnp.full((n_rays, 1), 3.0, jnp.float32)

    dst_Rs = rodrigues(0.3 * jax.random.normal(ks[2], (TOTAL_BONES, 3), jnp.float32))
    dst_Ts = 0.2 * jax.random.normal(ks[3], (TOTAL_BONES, 3), jnp.float32)
    cnl_R = rodrigues(0.2 * jax.random.normal(ks[4], (TOTAL_BONES, 3), jnp.float32))
    cnl_t = 0.1 * jax.random.normal(ks[5], (TOTAL_BONES, 3), jnp.float32)
    cnl_gtfms = jnp.zeros((TOTAL_BONES, 4, 4), jnp.float32)
    cnl_gtfms = cnl_gtfms.at[:, :3, :3].set(cnl_R).at[:, :3, 3].set(cnl_t).at[:, 3, 3].set(1.0)

    vs = CFG['mweight_volume']['volume_size']
    motion_weights_priors = jax.random.uniform(
        ks[6], (TOTAL_BONES + 1, vs, vs, vs), jnp.float32, minval=0.05, maxval=1.0)
    dst_posevec = 0.1 * jax.random.normal(ks[7], (COND,), jnp.float32)

    cnl_bbox_min_xyz = jnp.array([-4.0, -4.0, -4.0], jnp.float32)
    cnl_bbox_scale_xyz = jnp.array([0.25, 0.25, 0.25], jnp.float32)   # maps [-4, 4] -> [-1, 1]
    bgcolor = jnp.array([32.0, 64.0, 128.0], jnp.float32)

    params = init_params(0)
    out = humannerf_forward(params, (rays_o, rays_d), dst_Rs, dst_Ts, cnl_gtfms,
                            motion_weights_priors, dst_posevec, near, far,
                            cnl_bbox_min_xyz, cnl_bbox_scale_xyz, bgcolor, iter_val=1e7)
    out = jax.block_until_ready(out)

    assert out['rgb'].shape == (H, W, 3)
    assert out['alpha'].shape == (H, W)
    assert out['depth'].shape == (H, W)
    assert all(bool(jnp.all(jnp.isfinite(v))) for v in out.values())
    print("KERNEL_OK")
</pallas_src>

<mosaic_0001>
module attributes {stable_mosaic.version = 11 : i64} {
  func.func @_bone_coord_kernel(%arg0: i32, %arg1: memref<1024x3xf32, #tpu.memory_space<vmem>>, %arg2: memref<3x128xf32, #tpu.memory_space<vmem>>, %arg3: memref<1x128xf32, #tpu.memory_space<vmem>>, %arg4: memref<1024x128xf32, #tpu.memory_space<vmem>>) attributes {dimension_semantics = [#tpu.dimension_semantics<parallel>], iteration_bounds = array<i64: 2>, scalar_prefetch = 0 : i64, scratch_operands = 0 : i64, tpu.core_type = #tpu.core_type<tc>, window_params = [{transform_indices = @transform_0, window_bounds = array<i64: 1024, 3>}, {pipeline_mode = #tpu.pipeline_mode<synchronous>, transform_indices = @transform_1, window_bounds = array<i64: 3, 128>}, {pipeline_mode = #tpu.pipeline_mode<synchronous>, transform_indices = @transform_2, window_bounds = array<i64: 1, 128>}, {transform_indices = @transform_3, window_bounds = array<i64: 1024, 128>}]} {
    %c0 = arith.constant 0 : index
    %c0_0 = arith.constant 0 : index
    %0 = vector.load %arg1[%c0, %c0_0] : memref<1024x3xf32, #tpu.memory_space<vmem>>, vector<1024x3xf32>
    %c0_1 = arith.constant 0 : index
    %c0_2 = arith.constant 0 : index
    %1 = vector.load %arg2[%c0_1, %c0_2] : memref<3x128xf32, #tpu.memory_space<vmem>>, vector<3x128xf32>
    %2 = vector.extract_strided_slice %0 {offsets = [0, 0], sizes = [1024, 1], strides = [1, 1]} : vector<1024x3xf32> to vector<1024x1xf32>
    %3 = vector.extract_strided_slice %1 {offsets = [0, 0], sizes = [1, 128], strides = [1, 1]} : vector<3x128xf32> to vector<1x128xf32>
    %4 = vector.broadcast %2 : vector<1024x1xf32> to vector<1024x128xf32>
    %5 = vector.broadcast %3 : vector<1x128xf32> to vector<1024x128xf32>
    %6 = arith.mulf %4, %5 : vector<1024x128xf32>
    %7 = vector.extract_strided_slice %0 {offsets = [0, 1], sizes = [1024, 1], strides = [1, 1]} : vector<1024x3xf32> to vector<1024x1xf32>
    %8 = vector.extract_strided_slice %1 {offsets = [1, 0], sizes = [1, 128], strides = [1, 1]} : vector<3x128xf32> to vector<1x128xf32>
    %9 = vector.broadcast %7 : vector<1024x1xf32> to vector<1024x128xf32>
    %10 = vector.broadcast %8 : vector<1x128xf32> to vector<1024x128xf32>
    %11 = arith.mulf %9, %10 : vector<1024x128xf32>
    %12 = arith.addf %6, %11 : vector<1024x128xf32>
    %13 = vector.extract_strided_slice %0 {offsets = [0, 2], sizes = [1024, 1], strides = [1, 1]} : vector<1024x3xf32> to vector<1024x1xf32>
    %14 = vector.extract_strided_slice %1 {offsets = [2, 0], sizes = [1, 128], strides = [1, 1]} : vector<3x128xf32> to vector<1x128xf32>
    %15 = vector.broadcast %13 : vector<1024x1xf32> to vector<1024x128xf32>
    %16 = vector.broadcast %14 : vector<1x128xf32> to vector<1024x128xf32>
    %17 = arith.mulf %15, %16 : vector<1024x128xf32>
    %18 = arith.addf %12, %17 : vector<1024x128xf32>
    %c0_3 = arith.constant 0 : index
    %c0_4 = arith.constant 0 : index
    %19 = vector.load %arg3[%c0_3, %c0_4] : memref<1x128xf32, #tpu.memory_space<vmem>>, vector<1x128xf32>
    %20 = vector.broadcast %19 : vector<1x128xf32> to vector<1024x128xf32>
    %21 = arith.addf %18, %20 : vector<1024x128xf32>
    %c0_5 = arith.constant 0 : index
    %c0_6 = arith.constant 0 : index
    %22 = vector.load %arg4[%c0_5, %c0_6] : memref<1024x128xf32, #tpu.memory_space<vmem>>, vector<1024x128xf32>
    tpu.vector_store %arg4[%c0_5, %c0_6], %21 {strides = array<i32>} : memref<1024x128xf32, #tpu.memory_space<vmem>>, vector<1024x128xf32>,
    return
  }
  func.func @transform_0(%arg0: i32) -> (i32, i32) {
    %c0_i32 = arith.constant 0 : i32
    %c0_i32_0 = arith.constant 0 : i32
    return %arg0, %c0_i32 : i32, i32
  }
  func.func @transform_1(%arg0: i32) -> (i32, i32) {
    %c0_i32 = arith.constant 0 : i32
    %c0_i32_0 = arith.constant 0 : i32
    %c0_i32_1 = arith.constant 0 : i32
    return %c0_i32, %c0_i32_0 : i32, i32
  }
  func.func @transform_2(%arg0: i32) -> (i32, i32) {
    %c0_i32 = arith.constant 0 : i32
    %c0_i32_0 = arith.constant 0 : i32
    %c0_i32_1 = arith.constant 0 : i32
    return %c0_i32, %c0_i32_0 : i32, i32
  }
  func.func @transform_3(%arg0: i32) -> (i32, i32) {
    %c0_i32 = arith.constant 0 : i32
    %c0_i32_0 = arith.constant 0 : i32
    return %arg0, %c0_i32 : i32, i32
  }
}

</mosaic_0001>

<llo_original>
// kernel: tpu_custom_call.1
$region0: #{tpu_custom_call.1}
  #allocation0 [shape = 'u32[]', space=smem, size = 0x4, offset = 0x4, fixed_abs, tag = 'smem constant byte address 0x4 - core index']
  #allocation1 [shape = 'u32[144,128]{1,0:T(1,128)}', space=vmem, size = 0x12000, scoped, tag = 'internal scratch']
  %s0 = inlined_call_operand.vmem [shape: f32[2048,3], index: 0, kind: input, shape index: {}]
  %s1 = inlined_call_operand.vmem [shape: f32[3,128], index: 1, kind: input, shape index: {}]
  %s2 = inlined_call_operand.vmem [shape: f32[1,128], index: 2, kind: input, shape index: {}]
  %s3 = inlined_call_operand.hbm [shape: f32[2048,128], index: 3, kind: output, shape index: {}]
  %s4 = sld [smem:[#allocation0]]
  $region45: #{tpu_custom_call.1} parent=0
    _
  %s6 = ssub.s32 1, %s4
  %s7 = scalar_select 0, %s6, %s4
  $region1: #{tpu_custom_call.1} parent=0
    #allocation2 [shape = 'u8[1048576]{0}', space=vmem, size = 0x100000, scoped, tag = 'output window, operand 0']
    #allocation3 [shape = 's32[2]{0}', space=sflag, size = 0x8, scoped, tag = 'scoped memory for tpu_custom_call.1']
    %8 = vsyncpa [#allocation3], 0
    %s9 = scalar_lea.sflag [#allocation3], 1
    %10 = vsyncpa %s9, 0
    loop: start=0, step=1, limit=4
    $region2: #{tpu_custom_call.1} parent=1 // loop_pre_header
      _
    $region3: #{tpu_custom_call.1} parent=1 // loop_header
      %s12 = sphi 0, %s16
      %p13 = scmp.ge.s32.totalorder %s12, 4
      %s22 = sphi 0, %s24
      %s25 = sphi 0, %s22
      %s26 = sphi 0, %s25
      %s42 = sphi 0, %s26
      %s46 = sphi 0, %s46
      %s48 = sphi 0, %s46
      %s49 = sphi 0, %s48
      %s63 = sphi 0, %s49
      %s67 = sphi 0, %s67
      %s69 = sphi 0, %s67
      %s70 = sphi 0, %s69
      %s84 = sphi 0, %s70
      %s90 = sphi 0, %s92
      %s93 = sphi 0, %s90
      %s94 = sphi 0, %s93
      %s110 = sphi 0, %s94
    $region4: #{tpu_custom_call.1} parent=1 // loop_header_branch
      %15 = sbr.rel (%p13) target = $region8
    $region5: #{tpu_custom_call.1} parent=1 // loop_body
      %s17 = ssub.s32 %s12, 1
      %s18 = ssub.s32 %s12, 2
      %s19 = sadd.s32 %s12, 1
      %s20 = ssub.s32 %s12, %s19
      %p21 = scmp.eq.s32.totalorder %s20, 0
      %s23 = sadd.s32 %s22, 1
      %s24 = scalar_select %p21, %s22, %s23
      %p27 = pneg %p21
      %p28 = scmp.eq.s32.totalorder %s12, 1
      %p29 = por %p27, %p28
      %p30 = scmp.ne.s32.totalorder %s22, %s25
      %p31 = scmp.eq.s32.totalorder %s12, 0
      %p32 = por %p30, %p31
      %p33 = scmp.ne.s32.totalorder %s22, %s25
      %p34 = scmp.eq.s32.totalorder %s17, 1
      %p35 = por %p33, %p34
      %p36 = scmp.ne.s32.totalorder %s25, %s26
      %p37 = scmp.eq.s32.totalorder %s17, 0
      %p38 = por %p36, %p37
      %p39 = scmp.ne.s32.totalorder %s25, %s26
      %p40 = scmp.eq.s32.totalorder %s18, 1
      %p41 = por %p39, %p40
      %p43 = scmp.ne.s32.totalorder %s26, %s42
      %p44 = scmp.eq.s32.totalorder %s18, 0
      %p45 = por %p43, %p44
      %s47 = sadd.s32 %s46, 1
      %p50 = scmp.eq.s32.totalorder %s12, 1
      %p51 = scmp.ne.s32.totalorder %s46, %s48
      %p52 = scmp.eq.s32.totalorder %s12, 0
      %p53 = por %p51, %p52
      %p54 = scmp.ne.s32.totalorder %s46, %s48
      %p55 = scmp.eq.s32.totalorder %s17, 1
      %p56 = por %p54, %p55
      %p57 = scmp.ne.s32.totalorder %s48, %s49
      %p58 = scmp.eq.s32.totalorder %s17, 0
      %p59 = por %p57, %p58
      %p60 = scmp.ne.s32.totalorder %s48, %s49
      %p61 = scmp.eq.s32.totalorder %s18, 1
      %p62 = por %p60, %p61
      %p64 = scmp.ne.s32.totalorder %s49, %s63
      %p65 = scmp.eq.s32.totalorder %s18, 0
      %p66 = por %p64, %p65
      %s68 = sadd.s32 %s67, 1
      %p71 = scmp.eq.s32.totalorder %s12, 1
      %p72 = scmp.ne.s32.totalorder %s67, %s69
      %p73 = scmp.eq.s32.totalorder %s12, 0
      %p74 = por %p72, %p73
      %p75 = scmp.ne.s32.totalorder %s67, %s69
      %p76 = scmp.eq.s32.totalorder %s17, 1
      %p77 = por %p75, %p76
      %p78 = scmp.ne.s32.totalorder %s69, %s70
      %p79 = scmp.eq.s32.totalorder %s17, 0
      %p80 = por %p78, %p79
      %p81 = scmp.ne.s32.totalorder %s69, %s70
      %p82 = scmp.eq.s32.totalorder %s18, 1
      %p83 = por %p81, %p82
      %p85 = scmp.ne.s32.totalorder %s70, %s84
      %p86 = scmp.eq.s32.totalorder %s18, 0
      %p87 = por %p85, %p86
      %s88 = ssub.s32 %s12, %s19
      %p89 = scmp.eq.s32.totalorder %s88, 0
      %s91 = sadd.s32 %s90, 1
      %s92 = scalar_select %p89, %s90, %s91
      %p95 = pneg %p89
      %p96 = scmp.eq.s32.totalorder %s12, 1
      %p97 = por %p95, %p96
      %p98 = scmp.ne.s32.totalorder %s90, %s93
      %p99 = scmp.eq.s32.totalorder %s12, 0
      %p100 = por %p98, %p99
      %p101 = scmp.ne.s32.totalorder %s90, %s93
      %p102 = scmp.eq.s32.totalorder %s17, 1
      %p103 = por %p101, %p102
      %p104 = scmp.ne.s32.totalorder %s93, %s94
      %p105 = scmp.eq.s32.totalorder %s17, 0
      %p106 = por %p104, %p105
      %p107 = scmp.ne.s32.totalorder %s93, %s94
      %p108 = scmp.eq.s32.totalorder %s18, 1
      %p109 = por %p107, %p108
      %p111 = scmp.ne.s32.totalorder %s94, %s110
      %p112 = scmp.eq.s32.totalorder %s18, 0
      %p113 = por %p111, %p112
      %p114 = scmp.le.s32.totalorder 1, %s12
      %p115 = scmp.lt.s32.totalorder %s12, 3
      %p116 = pnand %p114, %p115
      %p117 = pneg %p116
      // Predicated region
      $region9: #{tpu_custom_call.1} parent=5 // pred_check
        _
      $region10: #{tpu_custom_call.1} parent=5 // pred_check_branch
        %119 = sbr.rel (%p116) target = $region12
      $region11: #{tpu_custom_call.1} parent=5 // pred_region
        %s120 = ssub.s32 %s12, 1
        // Predicated region
        $region13: #{tpu_custom_call.1} parent=11 // pred_check
          %p121 = pneg %p59
        $region14: #{tpu_custom_call.1} parent=11 // pred_check_branch
          %123 = sbr.rel (%p121) target = $region16
        $region15: #{tpu_custom_call.1} parent=11 // pred_region
          _
        $region16: #{tpu_custom_call.1} parent=11 // pred_fallthru
          _
        // Predicated region
        $region17: #{tpu_custom_call.1} parent=11 // pred_check
          %p124 = pneg %p80
        $region18: #{tpu_custom_call.1} parent=11 // pred_check_branch
          %126 = sbr.rel (%p124) target = $region20
        $region19: #{tpu_custom_call.1} parent=11 // pred_region
          _
        $region20: #{tpu_custom_call.1} parent=11 // pred_fallthru
          _
      $region12: #{tpu_custom_call.1} parent=5 // pred_fallthru
        _
      %p127 = scmp.lt.s32.totalorder %s12, 2
      // Predicated region
      $region21: #{tpu_custom_call.1} parent=5 // pred_check
        %p128 = pneg %p127
      $region22: #{tpu_custom_call.1} parent=5 // pred_check_branch
        %130 = sbr.rel (%p128) target = $region24
      $region23: #{tpu_custom_call.1} parent=5 // pred_region
        // Predicated region
        $region25: #{tpu_custom_call.1} parent=23 // pred_check
          %p131 = pneg %p32
        $region26: #{tpu_custom_call.1} parent=23 // pred_check_branch
          %133 = sbr.rel (%p131) target = $region28
        $region27: #{tpu_custom_call.1} parent=23 // pred_region
          %s134 = smul.u32 128, %s12
          %p135 = scmp.lt.s32.totalorder %s134, 255
          %s136 = scalar_select %p135, %s134, 255
          %s137 = smul.addr %s136, 8
          %s138 = scalar_lea.vmem %s0, %s137
          %s139 = smul.u32 128, %s12
        $region28: #{tpu_custom_call.1} parent=23 // pred_fallthru
          _
      $region24: #{tpu_custom_call.1} parent=5 // pred_fallthru
        _
      %p140 = scmp.le.s32.totalorder 1, %s12
      %p141 = scmp.lt.s32.totalorder %s12, 3
      %p142 = pnand %p140, %p141
      %p143 = pneg %p142
      // Predicated region
      $region29: #{tpu_custom_call.1} parent=5 // pred_check
        _
      $region30: #{tpu_custom_call.1} parent=5 // pred_check_branch
        %145 = sbr.rel (%p142) target = $region32
      $region31: #{tpu_custom_call.1} parent=5 // pred_region
        %s146 = ssub.s32 %s12, 1
        %s147 = smul.u32 128, %s17
        %p148 = scmp.lt.s32.totalorder %s147, 255
        %s149 = scalar_select %p148, %s147, 255
        %s150 = smul.addr %s149, 8
        %s151 = scalar_lea.vmem %s0, %s150
        %p152 = pneg %p38
        %p153 = pneg %p35
        %p154 = pneg %p59
        %p155 = pneg %p56
        %p156 = pneg %p80
        %p157 = pneg %p77
        %p158 = pneg %p106
        %p159 = pneg %p103
        %s160 = sand.u32 %s93, 1
        %s161 = scalar_lea.sflag [#allocation3], %s160
        %s162 = sand.u32 %s93, 1
        %s163 = smul.addr %s162, 1024
        %s164 = scalar_lea.vmem [#allocation2], %s163
        %s165 = smul.u32 128, %s17
        %p166 = scmp.lt.s32.totalorder %s165, 255
        %s167 = scalar_select %p166, %s165, 255
        %s168 = smul.addr %s167, 8
        %s169 = scalar_lea.vmem %s0, %s168
        %s170 = smul.u32 128, %s17
        %s171 = smul.u32 128, %s17
        %v172 = vld [vmem:[%s169] sm:$0xff]
        %v173 = vld [vmem:[%s169 + $0x8] sm:$0xff]
        %v174 = vld [vmem:[%s169 + $0x10] sm:$0xff]
        %v175 = vld [vmem:[%s169 + $0x18] sm:$0xff]
        %v176 = vld [vmem:[%s169 + $0x20] sm:$0xff]
        %v177 = vld [vmem:[%s169 + $0x28] sm:$0xff]
        %v178 = vld [vmem:[%s169 + $0x30] sm:$0xff]
        %v179 = vld [vmem:[%s169 + $0x38] sm:$0xff]
        %v180 = vld [vmem:[%s169 + $0x40] sm:$0xff]
        %v181 = vld [vmem:[%s169 + $0x48] sm:$0xff]
        %v182 = vld [vmem:[%s169 + $0x50] sm:$0xff]
        %v183 = vld [vmem:[%s169 + $0x58] sm:$0xff]
        %v184 = vld [vmem:[%s169 + $0x60] sm:$0xff]
        %v185 = vld [vmem:[%s169 + $0x68] sm:$0xff]
        %v186 = vld [vmem:[%s169 + $0x70] sm:$0xff]
        %v187 = vld [vmem:[%s169 + $0x78] sm:$0xff]
        %v188 = vld [vmem:[%s169 + $0x80] sm:$0xff]
        %v189 = vld [vmem:[%s169 + $0x88] sm:$0xff]
        %v190 = vld [vmem:[%s169 + $0x90] sm:$0xff]
        %v191 = vld [vmem:[%s169 + $0x98] sm:$0xff]
        %v192 = vld [vmem:[%s169 + $0xa0] sm:$0xff]
        %v193 = vld [vmem:[%s169 + $0xa8] sm:$0xff]
        %v194 = vld [vmem:[%s169 + $0xb0] sm:$0xff]
        %v195 = vld [vmem:[%s169 + $0xb8] sm:$0xff]
        %v196 = vld [vmem:[%s169 + $0xc0] sm:$0xff]
        %v197 = vld [vmem:[%s169 + $0xc8] sm:$0xff]
        %v198 = vld [vmem:[%s169 + $0xd0] sm:$0xff]
        %v199 = vld [vmem:[%s169 + $0xd8] sm:$0xff]
        %v200 = vld [vmem:[%s169 + $0xe0] sm:$0xff]
        %v201 = vld [vmem:[%s169 + $0xe8] sm:$0xff]
        %v202 = vld [vmem:[%s169 + $0xf0] sm:$0xff]
        %v203 = vld [vmem:[%s169 + $0xf8] sm:$0xff]
        %v204 = vld [vmem:[%s169 + $0x100] sm:$0xff]
        %v205 = vld [vmem:[%s169 + $0x108] sm:$0xff]
        %v206 = vld [vmem:[%s169 + $0x110] sm:$0xff]
        %v207 = vld [vmem:[%s169 + $0x118] sm:$0xff]
        %v208 = vld [vmem:[%s169 + $0x120] sm:$0xff]
        %v209 = vld [vmem:[%s169 + $0x128] sm:$0xff]
        %v210 = vld [vmem:[%s169 + $0x130] sm:$0xff]
        %v211 = vld [vmem:[%s169 + $0x138] sm:$0xff]
        %v212 = vld [vmem:[%s169 + $0x140] sm:$0xff]
        %v213 = vld [vmem:[%s169 + $0x148] sm:$0xff]
        %v214 = vld [vmem:[%s169 + $0x150] sm:$0xff]
        %v215 = vld [vmem:[%s169 + $0x158] sm:$0xff]
        %v216 = vld [vmem:[%s169 + $0x160] sm:$0xff]
        %v217 = vld [vmem:[%s169 + $0x168] sm:$0xff]
        %v218 = vld [vmem:[%s169 + $0x170] sm:$0xff]
        %v219 = vld [vmem:[%s169 + $0x178] sm:$0xff]
        %v220 = vld [vmem:[%s169 + $0x180] sm:$0xff]
        %v221 = vld [vmem:[%s169 + $0x188] sm:$0xff]
        %v222 = vld [vmem:[%s169 + $0x190] sm:$0xff]
        %v223 = vld [vmem:[%s169 + $0x198] sm:$0xff]
        %v224 = vld [vmem:[%s169 + $0x1a0] sm:$0xff]
        %v225 = vld [vmem:[%s169 + $0x1a8] sm:$0xff]
        %v226 = vld [vmem:[%s169 + $0x1b0] sm:$0xff]
        %v227 = vld [vmem:[%s169 + $0x1b8] sm:$0xff]
        %v228 = vld [vmem:[%s169 + $0x1c0] sm:$0xff]
        %v229 = vld [vmem:[%s169 + $0x1c8] sm:$0xff]
        %v230 = vld [vmem:[%s169 + $0x1d0] sm:$0xff]
        %v231 = vld [vmem:[%s169 + $0x1d8] sm:$0xff]
        %v232 = vld [vmem:[%s169 + $0x1e0] sm:$0xff]
        %v233 = vld [vmem:[%s169 + $0x1e8] sm:$0xff]
        %v234 = vld [vmem:[%s169 + $0x1f0] sm:$0xff]
        %v235 = vld [vmem:[%s169 + $0x1f8] sm:$0xff]
        %v236 = vld [vmem:[%s169 + $0x200] sm:$0xff]
        %v237 = vld [vmem:[%s169 + $0x208] sm:$0xff]
        %v238 = vld [vmem:[%s169 + $0x210] sm:$0xff]
        %v239 = vld [vmem:[%s169 + $0x218] sm:$0xff]
        %v240 = vld [vmem:[%s169 + $0x220] sm:$0xff]
        %v241 = vld [vmem:[%s169 + $0x228] sm:$0xff]
        %v242 = vld [vmem:[%s169 + $0x230] sm:$0xff]
        %v243 = vld [vmem:[%s169 + $0x238] sm:$0xff]
        %v244 = vld [vmem:[%s169 + $0x240] sm:$0xff]
        %v245 = vld [vmem:[%s169 + $0x248] sm:$0xff]
        %v246 = vld [vmem:[%s169 + $0x250] sm:$0xff]
        %v247 = vld [vmem:[%s169 + $0x258] sm:$0xff]
        %v248 = vld [vmem:[%s169 + $0x260] sm:$0xff]
        %v249 = vld [vmem:[%s169 + $0x268] sm:$0xff]
        %v250 = vld [vmem:[%s169 + $0x270] sm:$0xff]
        %v251 = vld [vmem:[%s169 + $0x278] sm:$0xff]
        %v252 = vld [vmem:[%s169 + $0x280] sm:$0xff]
        %v253 = vld [vmem:[%s169 + $0x288] sm:$0xff]
        %v254 = vld [vmem:[%s169 + $0x290] sm:$0xff]
        %v255 = vld [vmem:[%s169 + $0x298] sm:$0xff]
        %v256 = vld [vmem:[%s169 + $0x2a0] sm:$0xff]
        %v257 = vld [vmem:[%s169 + $0x2a8] sm:$0xff]
        %v258 = vld [vmem:[%s169 + $0x2b0] sm:$0xff]
        %v259 = vld [vmem:[%s169 + $0x2b8] sm:$0xff]
        %v260 = vld [vmem:[%s169 + $0x2c0] sm:$0xff]
        %v261 = vld [vmem:[%s169 + $0x2c8] sm:$0xff]
        %v262 = vld [vmem:[%s169 + $0x2d0] sm:$0xff]
        %v263 = vld [vmem:[%s169 + $0x2d8] sm:$0xff]
        %v264 = vld [vmem:[%s169 + $0x2e0] sm:$0xff]
        %v265 = vld [vmem:[%s169 + $0x2e8] sm:$0xff]
        %v266 = vld [vmem:[%s169 + $0x2f0] sm:$0xff]
        %v267 = vld [vmem:[%s169 + $0x2f8] sm:$0xff]
        %v268 = vld [vmem:[%s169 + $0x300] sm:$0xff]
        %v269 = vld [vmem:[%s169 + $0x308] sm:$0xff]
        %v270 = vld [vmem:[%s169 + $0x310] sm:$0xff]
        %v271 = vld [vmem:[%s169 + $0x318] sm:$0xff]
        %v272 = vld [vmem:[%s169 + $0x320] sm:$0xff]
        %v273 = vld [vmem:[%s169 + $0x328] sm:$0xff]
        %v274 = vld [vmem:[%s169 + $0x330] sm:$0xff]
        %v275 = vld [vmem:[%s169 + $0x338] sm:$0xff]
        %v276 = vld [vmem:[%s169 + $0x340] sm:$0xff]
        %v277 = vld [vmem:[%s169 + $0x348] sm:$0xff]
        %v278 = vld [vmem:[%s169 + $0x350] sm:$0xff]
        %v279 = vld [vmem:[%s169 + $0x358] sm:$0xff]
        %v280 = vld [vmem:[%s169 + $0x360] sm:$0xff]
        %v281 = vld [vmem:[%s169 + $0x368] sm:$0xff]
        %v282 = vld [vmem:[%s169 + $0x370] sm:$0xff]
        %v283 = vld [vmem:[%s169 + $0x378] sm:$0xff]
        %v284 = vld [vmem:[%s169 + $0x380] sm:$0xff]
        %v285 = vld [vmem:[%s169 + $0x388] sm:$0xff]
        %v286 = vld [vmem:[%s169 + $0x390] sm:$0xff]
        %v287 = vld [vmem:[%s169 + $0x398] sm:$0xff]
        %v288 = vld [vmem:[%s169 + $0x3a0] sm:$0xff]
        %v289 = vld [vmem:[%s169 + $0x3a8] sm:$0xff]
        %v290 = vld [vmem:[%s169 + $0x3b0] sm:$0xff]
        %v291 = vld [vmem:[%s169 + $0x3b8] sm:$0xff]
        %v292 = vld [vmem:[%s169 + $0x3c0] sm:$0xff]
        %v293 = vld [vmem:[%s169 + $0x3c8] sm:$0xff]
        %v294 = vld [vmem:[%s169 + $0x3d0] sm:$0xff]
        %v295 = vld [vmem:[%s169 + $0x3d8] sm:$0xff]
        %v296 = vld [vmem:[%s169 + $0x3e0] sm:$0xff]
        %v297 = vld [vmem:[%s169 + $0x3e8] sm:$0xff]
        %v298 = vld [vmem:[%s169 + $0x3f0] sm:$0xff]
        %v299 = vld [vmem:[%s169 + $0x3f8] sm:$0xff]
        %v300 = vld [vmem:[%s1] sm:$0x7]
        %302 = vset.pattern.permute.xlu0 0
        %303 = vperm.xlu0 %302, %v172
        %v304 = vpop.permute.xlu0 %303
        %307 = vset.pattern.permute.xlu0 0
        %308 = vperm.xlu0 %307, %v173
        %v309 = vpop.permute.xlu0 %308
        %312 = vset.pattern.permute.xlu0 0
        %313 = vperm.xlu0 %312, %v174
        %v314 = vpop.permute.xlu0 %313
        %317 = vset.pattern.permute.xlu0 0
        %318 = vperm.xlu0 %317, %v175
        %v319 = vpop.permute.xlu0 %318
        %322 = vset.pattern.permute.xlu0 0
        %323 = vperm.xlu0 %322, %v176
        %v324 = vpop.permute.xlu0 %323
        %327 = vset.pattern.permute.xlu0 0
        %328 = vperm.xlu0 %327, %v177
        %v329 = vpop.permute.xlu0 %328
        %332 = vset.pattern.permute.xlu0 0
        %333 = vperm.xlu0 %332, %v178
        %v334 = vpop.permute.xlu0 %333
        %337 = vset.pattern.permute.xlu0 0
        %338 = vperm.xlu0 %337, %v179
        %v339 = vpop.permute.xlu0 %338
        %342 = vset.pattern.permute.xlu0 0
        %343 = vperm.xlu0 %342, %v180
        %v344 = vpop.permute.xlu0 %343
        %347 = vset.pattern.permute.xlu0 0
        %348 = vperm.xlu0 %347, %v181
        %v349 = vpop.permute.xlu0 %348
        %352 = vset.pattern.permute.xlu0 0
        %353 = vperm.xlu0 %352, %v182
        %v354 = vpop.permute.xlu0 %353
        %357 = vset.pattern.permute.xlu0 0
        %358 = vperm.xlu0 %357, %v183
        %v359 = vpop.permute.xlu0 %358
        %362 = vset.pattern.permute.xlu0 0
        %363 = vperm.xlu0 %362, %v184
        %v364 = vpop.permute.xlu0 %363
        %367 = vset.pattern.permute.xlu0 0
        %368 = vperm.xlu0 %367, %v185
        %v369 = vpop.permute.xlu0 %368
        %372 = vset.pattern.permute.xlu0 0
        %373 = vperm.xlu0 %372, %v186
        %v374 = vpop.permute.xlu0 %373
        %377 = vset.pattern.permute.xlu0 0
        %378 = vperm.xlu0 %377, %v187
        %v379 = vpop.permute.xlu0 %378
        %382 = vset.pattern.permute.xlu0 0
        %383 = vperm.xlu0 %382, %v188
        %v384 = vpop.permute.xlu0 %383
        %387 = vset.pattern.permute.xlu0 0
        %388 = vperm.xlu0 %387, %v189
        %v389 = vpop.permute.xlu0 %388
        %392 = vset.pattern.permute.xlu0 0
        %393 = vperm.xlu0 %392, %v190
        %v394 = vpop.permute.xlu0 %393
        %397 = vset.pattern.permute.xlu0 0
        %398 = vperm.xlu0 %397, %v191
        %v399 = vpop.permute.xlu0 %398
        %402 = vset.pattern.permute.xlu0 0
        %403 = vperm.xlu0 %402, %v192
        %v404 = vpop.permute.xlu0 %403
        %407 = vset.pattern.permute.xlu0 0
        %408 = vperm.xlu0 %407, %v193
        %v409 = vpop.permute.xlu0 %408
        %412 = vset.pattern.permute.xlu0 0
        %413 = vperm.xlu0 %412, %v194
        %v414 = vpop.permute.xlu0 %413
        %417 = vset.pattern.permute.xlu0 0
        %418 = vperm.xlu0 %417, %v195
        %v419 = vpop.permute.xlu0 %418
        %422 = vset.pattern.permute.xlu0 0
        %423 = vperm.xlu0 %422, %v196
        %v424 = vpop.permute.xlu0 %423
        %427 = vset.pattern.permute.xlu0 0
        %428 = vperm.xlu0 %427, %v197
        %v429 = vpop.permute.xlu0 %428
        %432 = vset.pattern.permute.xlu0 0
        %433 = vperm.xlu0 %432, %v198
        %v434 = vpop.permute.xlu0 %433
        %437 = vset.pattern.permute.xlu0 0
        %438 = vperm.xlu0 %437, %v199
        %v439 = vpop.permute.xlu0 %438
        %442 = vset.pattern.permute.xlu0 0
        %443 = vperm.xlu0 %442, %v200
        %v444 = vpop.permute.xlu0 %443
        %447 = vset.pattern.permute.xlu0 0
        %448 = vperm.xlu0 %447, %v201
        %v449 = vpop.permute.xlu0 %448
        %452 = vset.pattern.permute.xlu0 0
        %453 = vperm.xlu0 %452, %v202
        %v454 = vpop.permute.xlu0 %453
        %457 = vset.pattern.permute.xlu0 0
        %458 = vperm.xlu0 %457, %v203
        %v459 = vpop.permute.xlu0 %458
        %462 = vset.pattern.permute.xlu0 0
        %463 = vperm.xlu0 %462, %v204
        %v464 = vpop.permute.xlu0 %463
        %467 = vset.pattern.permute.xlu0 0
        %468 = vperm.xlu0 %467, %v205
        %v469 = vpop.permute.xlu0 %468
        %472 = vset.pattern.permute.xlu0 0
        %473 = vperm.xlu0 %472, %v206
        %v474 = vpop.permute.xlu0 %473
        %477 = vset.pattern.permute.xlu0 0
        %478 = vperm.xlu0 %477, %v207
        %v479 = vpop.permute.xlu0 %478
        %482 = vset.pattern.permute.xlu0 0
        %483 = vperm.xlu0 %482, %v208
        %v484 = vpop.permute.xlu0 %483
        %487 = vset.pattern.permute.xlu0 0
        %488 = vperm.xlu0 %487, %v209
        %v489 = vpop.permute.xlu0 %488
        %492 = vset.pattern.permute.xlu0 0
        %493 = vperm.xlu0 %492, %v210
        %v494 = vpop.permute.xlu0 %493
        %497 = vset.pattern.permute.xlu0 0
        %498 = vperm.xlu0 %497, %v211
        %v499 = vpop.permute.xlu0 %498
        %502 = vset.pattern.permute.xlu0 0
        %503 = vperm.xlu0 %502, %v212
        %v504 = vpop.permute.xlu0 %503
        %507 = vset.pattern.permute.xlu0 0
        %508 = vperm.xlu0 %507, %v213
        %v509 = vpop.permute.xlu0 %508
        %512 = vset.pattern.permute.xlu0 0
        %513 = vperm.xlu0 %512, %v214
        %v514 = vpop.permute.xlu0 %513
        %517 = vset.pattern.permute.xlu0 0
        %518 = vperm.xlu0 %517, %v215
        %v519 = vpop.permute.xlu0 %518
        %522 = vset.pattern.permute.xlu0 0
        %523 = vperm.xlu0 %522, %v216
        %v524 = vpop.permute.xlu0 %523
        %527 = vset.pattern.permute.xlu0 0
        %528 = vperm.xlu0 %527, %v217
        %v529 = vpop.permute.xlu0 %528
        %532 = vset.pattern.permute.xlu0 0
        %533 = vperm.xlu0 %532, %v218
        %v534 = vpop.permute.xlu0 %533
        %537 = vset.pattern.permute.xlu0 0
        %538 = vperm.xlu0 %537, %v219
        %v539 = vpop.permute.xlu0 %538
        %542 = vset.pattern.permute.xlu0 0
        %543 = vperm.xlu0 %542, %v220
        %v544 = vpop.permute.xlu0 %543
        %547 = vset.pattern.permute.xlu0 0
        %548 = vperm.xlu0 %547, %v221
        %v549 = vpop.permute.xlu0 %548
        %552 = vset.pattern.permute.xlu0 0
        %553 = vperm.xlu0 %552, %v222
        %v554 = vpop.permute.xlu0 %553
        %557 = vset.pattern.permute.xlu0 0
        %558 = vperm.xlu0 %557, %v223
        %v559 = vpop.permute.xlu0 %558
        %562 = vset.pattern.permute.xlu0 0
        %563 = vperm.xlu0 %562, %v224
        %v564 = vpop.permute.xlu0 %563
        %567 = vset.pattern.permute.xlu0 0
        %568 = vperm.xlu0 %567, %v225
        %v569 = vpop.permute.xlu0 %568
        %572 = vset.pattern.permute.xlu0 0
        %573 = vperm.xlu0 %572, %v226
        %v574 = vpop.permute.xlu0 %573
        %577 = vset.pattern.permute.xlu0 0
        %578 = vperm.xlu0 %577, %v227
        %v579 = vpop.permute.xlu0 %578
        %582 = vset.pattern.permute.xlu0 0
        %583 = vperm.xlu0 %582, %v228
        %v584 = vpop.permute.xlu0 %583
        %587 = vset.pattern.permute.xlu0 0
        %588 = vperm.xlu0 %587, %v229
        %v589 = vpop.permute.xlu0 %588
        %592 = vset.pattern.permute.xlu0 0
        %593 = vperm.xlu0 %592, %v230
        %v594 = vpop.permute.xlu0 %593
        %597 = vset.pattern.permute.xlu0 0
        %598 = vperm.xlu0 %597, %v231
        %v599 = vpop.permute.xlu0 %598
        %602 = vset.pattern.permute.xlu0 0
        %603 = vperm.xlu0 %602, %v232
        %v604 = vpop.permute.xlu0 %603
        %607 = vset.pattern.permute.xlu0 0
        %608 = vperm.xlu0 %607, %v233
        %v609 = vpop.permute.xlu0 %608
        %612 = vset.pattern.permute.xlu0 0
        %613 = vperm.xlu0 %612, %v234
        %v614 = vpop.permute.xlu0 %613
        %617 = vset.pattern.permute.xlu0 0
        %618 = vperm.xlu0 %617, %v235
        %v619 = vpop.permute.xlu0 %618
        %622 = vset.pattern.permute.xlu0 0
        %623 = vperm.xlu0 %622, %v236
        %v624 = vpop.permute.xlu0 %623
        %627 = vset.pattern.permute.xlu0 0
        %628 = vperm.xlu0 %627, %v237
        %v629 = vpop.permute.xlu0 %628
        %632 = vset.pattern.permute.xlu0 0
        %633 = vperm.xlu0 %632, %v238
        %v634 = vpop.permute.xlu0 %633
        %637 = vset.pattern.permute.xlu0 0
        %638 = vperm.xlu0 %637, %v239
        %v639 = vpop.permute.xlu0 %638
        %642 = vset.pattern.permute.xlu0 0
        %643 = vperm.xlu0 %642, %v240
        %v644 = vpop.permute.xlu0 %643
        %647 = vset.pattern.permute.xlu0 0
        %648 = vperm.xlu0 %647, %v241
        %v649 = vpop.permute.xlu0 %648
        %652 = vset.pattern.permute.xlu0 0
        %653 = vperm.xlu0 %652, %v242
        %v654 = vpop.permute.xlu0 %653
        %657 = vset.pattern.permute.xlu0 0
        %658 = vperm.xlu0 %657, %v243
        %v659 = vpop.permute.xlu0 %658
        %662 = vset.pattern.permute.xlu0 0
        %663 = vperm.xlu0 %662, %v244
        %v664 = vpop.permute.xlu0 %663
        %667 = vset.pattern.permute.xlu0 0
        %668 = vperm.xlu0 %667, %v245
        %v669 = vpop.permute.xlu0 %668
        %672 = vset.pattern.permute.xlu0 0
        %673 = vperm.xlu0 %672, %v246
        %v674 = vpop.permute.xlu0 %673
        %677 = vset.pattern.permute.xlu0 0
        %678 = vperm.xlu0 %677, %v247
        %v679 = vpop.permute.xlu0 %678
        %682 = vset.pattern.permute.xlu0 0
        %683 = vperm.xlu0 %682, %v248
        %v684 = vpop.permute.xlu0 %683
        %687 = vset.pattern.permute.xlu0 0
        %688 = vperm.xlu0 %687, %v249
        %v689 = vpop.permute.xlu0 %688
        %692 = vset.pattern.permute.xlu0 0
        %693 = vperm.xlu0 %692, %v250
        %v694 = vpop.permute.xlu0 %693
        %697 = vset.pattern.permute.xlu0 0
        %698 = vperm.xlu0 %697, %v251
        %v699 = vpop.permute.xlu0 %698
        %702 = vset.pattern.permute.xlu0 0
        %703 = vperm.xlu0 %702, %v252
        %v704 = vpop.permute.xlu0 %703
        %707 = vset.pattern.permute.xlu0 0
        %708 = vperm.xlu0 %707, %v253
        %v709 = vpop.permute.xlu0 %708
        %712 = vset.pattern.permute.xlu0 0
        %713 = vperm.xlu0 %712, %v254
        %v714 = vpop.permute.xlu0 %713
        %717 = vset.pattern.permute.xlu0 0
        %718 = vperm.xlu0 %717, %v255
        %v719 = vpop.permute.xlu0 %718
        %722 = vset.pattern.permute.xlu0 0
        %723 = vperm.xlu0 %722, %v256
        %v724 = vpop.permute.xlu0 %723
        %727 = vset.pattern.permute.xlu0 0
        %728 = vperm.xlu0 %727, %v257
        %v729 = vpop.permute.xlu0 %728
        %732 = vset.pattern.permute.xlu0 0
        %733 = vperm.xlu0 %732, %v258
        %v734 = vpop.permute.xlu0 %733
        %737 = vset.pattern.permute.xlu0 0
        %738 = vperm.xlu0 %737, %v259
        %v739 = vpop.permute.xlu0 %738
        %742 = vset.pattern.permute.xlu0 0
        %743 = vperm.xlu0 %742, %v260
        %v744 = vpop.permute.xlu0 %743
        %747 = vset.pattern.permute.xlu0 0
        %748 = vperm.xlu0 %747, %v261
        %v749 = vpop.permute.xlu0 %748
        %752 = vset.pattern.permute.xlu0 0
        %753 = vperm.xlu0 %752, %v262
        %v754 = vpop.permute.xlu0 %753
        %757 = vset.pattern.permute.xlu0 0
        %758 = vperm.xlu0 %757, %v263
        %v759 = vpop.permute.xlu0 %758
        %762 = vset.pattern.permute.xlu0 0
        %763 = vperm.xlu0 %762, %v264
        %v764 = vpop.permute.xlu0 %763
        %767 = vset.pattern.permute.xlu0 0
        %768 = vperm.xlu0 %767, %v265
        %v769 = vpop.permute.xlu0 %768
        %772 = vset.pattern.permute.xlu0 0
        %773 = vperm.xlu0 %772, %v266
        %v774 = vpop.permute.xlu0 %773
        %777 = vset.pattern.permute.xlu0 0
        %778 = vperm.xlu0 %777, %v267
        %v779 = vpop.permute.xlu0 %778
        %782 = vset.pattern.permute.xlu0 0
        %783 = vperm.xlu0 %782, %v268
        %v784 = vpop.permute.xlu0 %783
        %787 = vset.pattern.permute.xlu0 0
        %788 = vperm.xlu0 %787, %v269
        %v789 = vpop.permute.xlu0 %788
        %792 = vset.pattern.permute.xlu0 0
        %793 = vperm.xlu0 %792, %v270
        %v794 = vpop.permute.xlu0 %793
        %797 = vset.pattern.permute.xlu0 0
        %798 = vperm.xlu0 %797, %v271
        %v799 = vpop.permute.xlu0 %798
        %802 = vset.pattern.permute.xlu0 0
        %803 = vperm.xlu0 %802, %v272
        %v804 = vpop.permute.xlu0 %803
        %807 = vset.pattern.permute.xlu0 0
        %808 = vperm.xlu0 %807, %v273
        %v809 = vpop.permute.xlu0 %808
        %812 = vset.pattern.permute.xlu0 0
        %813 = vperm.xlu0 %812, %v274
        %v814 = vpop.permute.xlu0 %813
        %817 = vset.pattern.permute.xlu0 0
        %818 = vperm.xlu0 %817, %v275
        %v819 = vpop.permute.xlu0 %818
        %822 = vset.pattern.permute.xlu0 0
        %823 = vperm.xlu0 %822, %v276
        %v824 = vpop.permute.xlu0 %823
        %827 = vset.pattern.permute.xlu0 0
        %828 = vperm.xlu0 %827, %v277
        %v829 = vpop.permute.xlu0 %828
        %832 = vset.pattern.permute.xlu0 0
        %833 = vperm.xlu0 %832, %v278
        %v834 = vpop.permute.xlu0 %833
        %837 = vset.pattern.permute.xlu0 0
        %838 = vperm.xlu0 %837, %v279
        %v839 = vpop.permute.xlu0 %838
        %842 = vset.pattern.permute.xlu0 0
        %843 = vperm.xlu0 %842, %v280
        %v844 = vpop.permute.xlu0 %843
        %847 = vset.pattern.permute.xlu0 0
        %848 = vperm.xlu0 %847, %v281
        %v849 = vpop.permute.xlu0 %848
        %852 = vset.pattern.permute.xlu0 0
        %853 = vperm.xlu0 %852, %v282
        %v854 = vpop.permute.xlu0 %853
        %857 = vset.pattern.permute.xlu0 0
        %858 = vperm.xlu0 %857, %v283
        %v859 = vpop.permute.xlu0 %858
        %862 = vset.pattern.permute.xlu0 0
        %863 = vperm.xlu0 %862, %v284
        %v864 = vpop.permute.xlu0 %863
        %867 = vset.pattern.permute.xlu0 0
        %868 = vperm.xlu0 %867, %v285
        %v869 = vpop.permute.xlu0 %868
        %872 = vset.pattern.permute.xlu0 0
        %873 = vperm.xlu0 %872, %v286
        %v874 = vpop.permute.xlu0 %873
        %877 = vset.pattern.permute.xlu0 0
        %878 = vperm.xlu0 %877, %v287
        %v879 = vpop.permute.xlu0 %878
        %882 = vset.pattern.permute.xlu0 0
        %883 = vperm.xlu0 %882, %v288
        %v884 = vpop.permute.xlu0 %883
        %887 = vset.pattern.permute.xlu0 0
        %888 = vperm.xlu0 %887, %v289
        %v889 = vpop.permute.xlu0 %888
        %892 = vset.pattern.permute.xlu0 0
        %893 = vperm.xlu0 %892, %v290
        %v894 = vpop.permute.xlu0 %893
        %897 = vset.pattern.permute.xlu0 0
        %898 = vperm.xlu0 %897, %v291
        %v899 = vpop.permute.xlu0 %898
        %902 = vset.pattern.permute.xlu0 0
        %903 = vperm.xlu0 %902, %v292
        %v904 = vpop.permute.xlu0 %903
        %907 = vset.pattern.permute.xlu0 0
        %908 = vperm.xlu0 %907, %v293
        %v909 = vpop.permute.xlu0 %908
        %912 = vset.pattern.permute.xlu0 0
        %913 = vperm.xlu0 %912, %v294
        %v914 = vpop.permute.xlu0 %913
        %917 = vset.pattern.permute.xlu0 0
        %918 = vperm.xlu0 %917, %v295
        %v919 = vpop.permute.xlu0 %918
        %922 = vset.pattern.permute.xlu0 0
        %923 = vperm.xlu0 %922, %v296
        %v924 = vpop.permute.xlu0 %923
        %927 = vset.pattern.permute.xlu0 0
        %928 = vperm.xlu0 %927, %v297
        %v929 = vpop.permute.xlu0 %928
        %932 = vset.pattern.permute.xlu0 0
        %933 = vperm.xlu0 %932, %v298
        %v934 = vpop.permute.xlu0 %933
        %937 = vset.pattern.permute.xlu0 0
        %938 = vperm.xlu0 %937, %v299
        %v939 = vpop.permute.xlu0 %938
        %v941 = vlaneseq
        %v942 = vshrl.u32 %v941, 7
        %v943 = vsub.s32 0, %v942
        %v944 = vrot.slane %v300, %v943
        %v945 = vmul.f32 %v304, %v944
        %v946 = vmul.f32 %v309, %v944
        %v947 = vmul.f32 %v314, %v944
        %v948 = vmul.f32 %v319, %v944
        %v949 = vmul.f32 %v324, %v944
        %v950 = vmul.f32 %v329, %v944
        %v951 = vmul.f32 %v334, %v944
        %v952 = vmul.f32 %v339, %v944
        %v953 = vmul.f32 %v344, %v944
        %v954 = vmul.f32 %v349, %v944
        %v955 = vmul.f32 %v354, %v944
        %v956 = vmul.f32 %v359, %v944
        %v957 = vmul.f32 %v364, %v944
        %v958 = vmul.f32 %v369, %v944
        %v959 = vmul.f32 %v374, %v944
        %v960 = vmul.f32 %v379, %v944
        %v961 = vmul.f32 %v384, %v944
        %v962 = vmul.f32 %v389, %v944
        %v963 = vmul.f32 %v394, %v944
        %v964 = vmul.f32 %v399, %v944
        %v965 = vmul.f32 %v404, %v944
        %v966 = vmul.f32 %v409, %v944
        %v967 = vmul.f32 %v414, %v944
        %v968 = vmul.f32 %v419, %v944
        %v969 = vmul.f32 %v424, %v944
        %v970 = vmul.f32 %v429, %v944
        %v971 = vmul.f32 %v434, %v944
        %v972 = vmul.f32 %v439, %v944
        %v973 = vmul.f32 %v444, %v944
        %v974 = vmul.f32 %v449, %v944
        %v975 = vmul.f32 %v454, %v944
        %v976 = vmul.f32 %v459, %v944
        %v977 = vmul.f32 %v464, %v944
        %v978 = vmul.f32 %v469, %v944
        %v979 = vmul.f32 %v474, %v944
        %v980 = vmul.f32 %v479, %v944
        %v981 = vmul.f32 %v484, %v944
        %v982 = vmul.f32 %v489, %v944
        %v983 = vmul.f32 %v494, %v944
        %v984 = vmul.f32 %v499, %v944
        %v985 = vmul.f32 %v504, %v944
        %v986 = vmul.f32 %v509, %v944
        %v987 = vmul.f32 %v514, %v944
        %v988 = vmul.f32 %v519, %v944
        %v989 = vmul.f32 %v524, %v944
        %v990 = vmul.f32 %v529, %v944
        %v991 = vmul.f32 %v534, %v944
        %v992 = vmul.f32 %v539, %v944
        %v993 = vmul.f32 %v544, %v944
        %v994 = vmul.f32 %v549, %v944
        %v995 = vmul.f32 %v554, %v944
        %v996 = vmul.f32 %v559, %v944
        %v997 = vmul.f32 %v564, %v944
        %v998 = vmul.f32 %v569, %v944
        %v999 = vmul.f32 %v574, %v944
        %v1000 = vmul.f32 %v579, %v944
        %v1001 = vmul.f32 %v584, %v944
        %v1002 = vmul.f32 %v589, %v944
        %v1003 = vmul.f32 %v594, %v944
        %v1004 = vmul.f32 %v599, %v944
        %v1005 = vmul.f32 %v604, %v944
        %v1006 = vmul.f32 %v609, %v944
        %v1007 = vmul.f32 %v614, %v944
        %v1008 = vmul.f32 %v619, %v944
        %v1009 = vmul.f32 %v624, %v944
        %v1010 = vmul.f32 %v629, %v944
        %v1011 = vmul.f32 %v634, %v944
        %v1012 = vmul.f32 %v639, %v944
        %v1013 = vmul.f32 %v644, %v944
        %v1014 = vmul.f32 %v649, %v944
        %v1015 = vmul.f32 %v654, %v944
        %v1016 = vmul.f32 %v659, %v944
        %v1017 = vmul.f32 %v664, %v944
        %v1018 = vmul.f32 %v669, %v944
        %v1019 = vmul.f32 %v674, %v944
        %v1020 = vmul.f32 %v679, %v944
        %v1021 = vmul.f32 %v684, %v944
        %v1022 = vmul.f32 %v689, %v944
        %v1023 = vmul.f32 %v694, %v944
        %v1024 = vmul.f32 %v699, %v944
        %v1025 = vmul.f32 %v704, %v944
        %v1026 = vmul.f32 %v709, %v944
        %v1027 = vmul.f32 %v714, %v944
        %v1028 = vmul.f32 %v719, %v944
        %v1029 = vmul.f32 %v724, %v944
        %v1030 = vmul.f32 %v729, %v944
        %v1031 = vmul.f32 %v734, %v944
        %v1032 = vmul.f32 %v739, %v944
        %v1033 = vmul.f32 %v744, %v944
        %v1034 = vmul.f32 %v749, %v944
        %v1035 = vmul.f32 %v754, %v944
        %v1036 = vmul.f32 %v759, %v944
        %v1037 = vmul.f32 %v764, %v944
        %v1038 = vmul.f32 %v769, %v944
        %v1039 = vmul.f32 %v774, %v944
        %v1040 = vmul.f32 %v779, %v944
        %v1041 = vmul.f32 %v784, %v944
        %v1042 = vmul.f32 %v789, %v944
        %v1043 = vmul.f32 %v794, %v944
        %v1044 = vmul.f32 %v799, %v944
        %v1045 = vmul.f32 %v804, %v944
        %v1046 = vmul.f32 %v809, %v944
        %v1047 = vmul.f32 %v814, %v944
        %v1048 = vmul.f32 %v819, %v944
        %v1049 = vmul.f32 %v824, %v944
        %v1050 = vmul.f32 %v829, %v944
        %v1051 = vmul.f32 %v834, %v944
        %v1052 = vmul.f32 %v839, %v944
        %v1053 = vmul.f32 %v844, %v944
        %v1054 = vmul.f32 %v849, %v944
        %v1055 = vmul.f32 %v854, %v944
        %v1056 = vmul.f32 %v859, %v944
        %v1057 = vmul.f32 %v864, %v944
        %v1058 = vmul.f32 %v869, %v944
        %v1059 = vmul.f32 %v874, %v944
        %v1060 = vmul.f32 %v879, %v944
        %v1061 = vmul.f32 %v884, %v944
        %v1062 = vmul.f32 %v889, %v944
        %v1063 = vmul.f32 %v894, %v944
        %v1064 = vmul.f32 %v899, %v944
        %v1065 = vmul.f32 %v904, %v944
        %v1066 = vmul.f32 %v909, %v944
        %v1067 = vmul.f32 %v914, %v944
        %v1068 = vmul.f32 %v919, %v944
        %v1069 = vmul.f32 %v924, %v944
        %v1070 = vmul.f32 %v929, %v944
        %v1071 = vmul.f32 %v934, %v944
        %v1072 = vmul.f32 %v939, %v944
        %1073 = vset.pattern.permute.xlu0 1
        %1074 = vperm.xlu0 %1073, %v172
        %v1075 = vpop.permute.xlu0 %1074
        %1077 = vset.pattern.permute.xlu0 1
        %1078 = vperm.xlu0 %1077, %v173
        %v1079 = vpop.permute.xlu0 %1078
        %1081 = vset.pattern.permute.xlu0 1
        %1082 = vperm.xlu0 %1081, %v174
        %v1083 = vpop.permute.xlu0 %1082
        %1085 = vset.pattern.permute.xlu0 1
        %1086 = vperm.xlu0 %1085, %v175
        %v1087 = vpop.permute.xlu0 %1086
        %1089 = vset.pattern.permute.xlu0 1
        %1090 = vperm.xlu0 %1089, %v176
        %v1091 = vpop.permute.xlu0 %1090
        %1093 = vset.pattern.permute.xlu0 1
        %1094 = vperm.xlu0 %1093, %v177
        %v1095 = vpop.permute.xlu0 %1094
        %1097 = vset.pattern.permute.xlu0 1
        %1098 = vperm.xlu0 %1097, %v178
        %v1099 = vpop.permute.xlu0 %1098
        %1101 = vset.pattern.permute.xlu0 1
        %1102 = vperm.xlu0 %1101, %v179
        %v1103 = vpop.permute.xlu0 %1102
        %1105 = vset.pattern.permute.xlu0 1
        %1106 = vperm.xlu0 %1105, %v180
        %v1107 = vpop.permute.xlu0 %1106
        %1109 = vset.pattern.permute.xlu0 1
        %1110 = vperm.xlu0 %1109, %v181
        %v1111 = vpop.permute.xlu0 %1110
        %1113 = vset.pattern.permute.xlu0 1
        %1114 = vperm.xlu0 %1113, %v182
        %v1115 = vpop.permute.xlu0 %1114
        %1117 = vset.pattern.permute.xlu0 1
        %1118 = vperm.xlu0 %1117, %v183
        %v1119 = vpop.permute.xlu0 %1118
        %1121 = vset.pattern.permute.xlu0 1
        %1122 = vperm.xlu0 %1121, %v184
        %v1123 = vpop.permute.xlu0 %1122
        %1125 = vset.pattern.permute.xlu0 1
        %1126 = vperm.xlu0 %1125, %v185
        %v1127 = vpop.permute.xlu0 %1126
        %1129 = vset.pattern.permute.xlu0 1
        %1130 = vperm.xlu0 %1129, %v186
        %v1131 = vpop.permute.xlu0 %1130
        %1133 = vset.pattern.permute.xlu0 1
        %1134 = vperm.xlu0 %1133, %v187
        %v1135 = vpop.permute.xlu0 %1134
        %1137 = vset.pattern.permute.xlu0 1
        %1138 = vperm.xlu0 %1137, %v188
        %v1139 = vpop.permute.xlu0 %1138
        %1141 = vset.pattern.permute.xlu0 1
        %1142 = vperm.xlu0 %1141, %v189
        %v1143 = vpop.permute.xlu0 %1142
        %1145 = vset.pattern.permute.xlu0 1
        %1146 = vperm.xlu0 %1145, %v190
        %v1147 = vpop.permute.xlu0 %1146
        %1149 = vset.pattern.permute.xlu0 1
        %1150 = vperm.xlu0 %1149, %v191
        %v1151 = vpop.permute.xlu0 %1150
        %1153 = vset.pattern.permute.xlu0 1
        %1154 = vperm.xlu0 %1153, %v192
        %v1155 = vpop.permute.xlu0 %1154
        %1157 = vset.pattern.permute.xlu0 1
        %1158 = vperm.xlu0 %1157, %v193
        %v1159 = vpop.permute.xlu0 %1158
        %1161 = vset.pattern.permute.xlu0 1
        %1162 = vperm.xlu0 %1161, %v194
        %v1163 = vpop.permute.xlu0 %1162
        %1165 = vset.pattern.permute.xlu0 1
        %1166 = vperm.xlu0 %1165, %v195
        %v1167 = vpop.permute.xlu0 %1166
        %1169 = vset.pattern.permute.xlu0 1
        %1170 = vperm.xlu0 %1169, %v196
        %v1171 = vpop.permute.xlu0 %1170
        %1173 = vset.pattern.permute.xlu0 1
        %1174 = vperm.xlu0 %1173, %v197
        %v1175 = vpop.permute.xlu0 %1174
        %1177 = vset.pattern.permute.xlu0 1
        %1178 = vperm.xlu0 %1177, %v198
        %v1179 = vpop.permute.xlu0 %1178
        %1181 = vset.pattern.permute.xlu0 1
        %1182 = vperm.xlu0 %1181, %v199
        %v1183 = vpop.permute.xlu0 %1182
        %1185 = vset.pattern.permute.xlu0 1
        %1186 = vperm.xlu0 %1185, %v200
        %v1187 = vpop.permute.xlu0 %1186
        %1189 = vset.pattern.permute.xlu0 1
        %1190 = vperm.xlu0 %1189, %v201
        %v1191 = vpop.permute.xlu0 %1190
        %1193 = vset.pattern.permute.xlu0 1
        %1194 = vperm.xlu0 %1193, %v202
        %v1195 = vpop.permute.xlu0 %1194
        %1197 = vset.pattern.permute.xlu0 1
        %1198 = vperm.xlu0 %1197, %v203
        %v1199 = vpop.permute.xlu0 %1198
        %1201 = vset.pattern.permute.xlu0 1
        %1202 = vperm.xlu0 %1201, %v204
        %v1203 = vpop.permute.xlu0 %1202
        %1205 = vset.pattern.permute.xlu0 1
        %1206 = vperm.xlu0 %1205, %v205
        %v1207 = vpop.permute.xlu0 %1206
        %1209 = vset.pattern.permute.xlu0 1
        %1210 = vperm.xlu0 %1209, %v206
        %v1211 = vpop.permute.xlu0 %1210
        %1213 = vset.pattern.permute.xlu0 1
        %1214 = vperm.xlu0 %1213, %v207
        %v1215 = vpop.permute.xlu0 %1214
        %1217 = vset.pattern.permute.xlu0 1
        %1218 = vperm.xlu0 %1217, %v208
        %v1219 = vpop.permute.xlu0 %1218
        %1221 = vset.pattern.permute.xlu0 1
        %1222 = vperm.xlu0 %1221, %v209
        %v1223 = vpop.permute.xlu0 %1222
        %1225 = vset.pattern.permute.xlu0 1
        %1226 = vperm.xlu0 %1225, %v210
        %v1227 = vpop.permute.xlu0 %1226
        %1229 = vset.pattern.permute.xlu0 1
        %1230 = vperm.xlu0 %1229, %v211
        %v1231 = vpop.permute.xlu0 %1230
        %1233 = vset.pattern.permute.xlu0 1
        %1234 = vperm.xlu0 %1233, %v212
        %v1235 = vpop.permute.xlu0 %1234
        %1237 = vset.pattern.permute.xlu0 1
        %1238 = vperm.xlu0 %1237, %v213
        %v1239 = vpop.permute.xlu0 %1238
        %1241 = vset.pattern.permute.xlu0 1
        %1242 = vperm.xlu0 %1241, %v214
        %v1243 = vpop.permute.xlu0 %1242
        %1245 = vset.pattern.permute.xlu0 1
        %1246 = vperm.xlu0 %1245, %v215
        %v1247 = vpop.permute.xlu0 %1246
        %1249 = vset.pattern.permute.xlu0 1
        %1250 = vperm.xlu0 %1249, %v216
        %v1251 = vpop.permute.xlu0 %1250
        %1253 = vset.pattern.permute.xlu0 1
        %1254 = vperm.xlu0 %1253, %v217
        %v1255 = vpop.permute.xlu0 %1254
        %1257 = vset.pattern.permute.xlu0 1
        %1258 = vperm.xlu0 %1257, %v218
        %v1259 = vpop.permute.xlu0 %1258
        %1261 = vset.pattern.permute.xlu0 1
        %1262 = vperm.xlu0 %1261, %v219
        %v1263 = vpop.permute.xlu0 %1262
        %1265 = vset.pattern.permute.xlu0 1
        %1266 = vperm.xlu0 %1265, %v220
        %v1267 = vpop.permute.xlu0 %1266
        %1269 = vset.pattern.permute.xlu0 1
        %1270 = vperm.xlu0 %1269, %v221
        %v1271 = vpop.permute.xlu0 %1270
        %1273 = vset.pattern.permute.xlu0 1
        %1274 = vperm.xlu0 %1273, %v222
        %v1275 = vpop.permute.xlu0 %1274
        %1277 = vset.pattern.permute.xlu0 1
        %1278 = vperm.xlu0 %1277, %v223
        %v1279 = vpop.permute.xlu0 %1278
        %1281 = vset.pattern.permute.xlu0 1
        %1282 = vperm.xlu0 %1281, %v224
        %v1283 = vpop.permute.xlu0 %1282
        %1285 = vset.pattern.permute.xlu0 1
        %1286 = vperm.xlu0 %1285, %v225
        %v1287 = vpop.permute.xlu0 %1286
        %1289 = vset.pattern.permute.xlu0 1
        %1290 = vperm.xlu0 %1289, %v226
        %v1291 = vpop.permute.xlu0 %1290
        %1293 = vset.pattern.permute.xlu0 1
        %1294 = vperm.xlu0 %1293, %v227
        %v1295 = vpop.permute.xlu0 %1294
        %1297 = vset.pattern.permute.xlu0 1
        %1298 = vperm.xlu0 %1297, %v228
        %v1299 = vpop.permute.xlu0 %1298
        %1301 = vset.pattern.permute.xlu0 1
        %1302 = vperm.xlu0 %1301, %v229
        %v1303 = vpop.permute.xlu0 %1302
        %1305 = vset.pattern.permute.xlu0 1
        %1306 = vperm.xlu0 %1305, %v230
        %v1307 = vpop.permute.xlu0 %1306
        %1309 = vset.pattern.permute.xlu0 1
        %1310 = vperm.xlu0 %1309, %v231
        %v1311 = vpop.permute.xlu0 %1310
        %1313 = vset.pattern.permute.xlu0 1
        %1314 = vperm.xlu0 %1313, %v232
        %v1315 = vpop.permute.xlu0 %1314
        %1317 = vset.pattern.permute.xlu0 1
        %1318 = vperm.xlu0 %1317, %v233
        %v1319 = vpop.permute.xlu0 %1318
        %1321 = vset.pattern.permute.xlu0 1
        %1322 = vperm.xlu0 %1321, %v234
        %v1323 = vpop.permute.xlu0 %1322
        %1325 = vset.pattern.permute.xlu0 1
        %1326 = vperm.xlu0 %1325, %v235
        %v1327 = vpop.permute.xlu0 %1326
        %1329 = vset.pattern.permute.xlu0 1
        %1330 = vperm.xlu0 %1329, %v236
        %v1331 = vpop.permute.xlu0 %1330
        %1333 = vset.pattern.permute.xlu0 1
        %1334 = vperm.xlu0 %1333, %v237
        %v1335 = vpop.permute.xlu0 %1334
        %1337 = vset.pattern.permute.xlu0 1
        %1338 = vperm.xlu0 %1337, %v238
        %v1339 = vpop.permute.xlu0 %1338
        %1341 = vset.pattern.permute.xlu0 1
        %1342 = vperm.xlu0 %1341, %v239
        %v1343 = vpop.permute.xlu0 %1342
        %1345 = vset.pattern.permute.xlu0 1
        %1346 = vperm.xlu0 %1345, %v240
        %v1347 = vpop.permute.xlu0 %1346
        %1349 = vset.pattern.permute.xlu0 1
        %1350 = vperm.xlu0 %1349, %v241
        %v1351 = vpop.permute.xlu0 %1350
        %1353 = vset.pattern.permute.xlu0 1
        %1354 = vperm.xlu0 %1353, %v242
        %v1355 = vpop.permute.xlu0 %1354
        %1357 = vset.pattern.permute.xlu0 1
        %1358 = vperm.xlu0 %1357, %v243
        %v1359 = vpop.permute.xlu0 %1358
        %1361 = vset.pattern.permute.xlu0 1
        %1362 = vperm.xlu0 %1361, %v244
        %v1363 = vpop.permute.xlu0 %1362
        %1365 = vset.pattern.permute.xlu0 1
        %1366 = vperm.xlu0 %1365, %v245
        %v1367 = vpop.permute.xlu0 %1366
        %1369 = vset.pattern.permute.xlu0 1
        %1370 = vperm.xlu0 %1369, %v246
        %v1371 = vpop.permute.xlu0 %1370
        %1373 = vset.pattern.permute.xlu0 1
        %1374 = vperm.xlu0 %1373, %v247
        %v1375 = vpop.permute.xlu0 %1374
        %1377 = vset.pattern.permute.xlu0 1
        %1378 = vperm.xlu0 %1377, %v248
        %v1379 = vpop.permute.xlu0 %1378
        %1381 = vset.pattern.permute.xlu0 1
        %1382 = vperm.xlu0 %1381, %v249
        %v1383 = vpop.permute.xlu0 %1382
        %1385 = vset.pattern.permute.xlu0 1
        %1386 = vperm.xlu0 %1385, %v250
        %v1387 = vpop.permute.xlu0 %1386
        %1389 = vset.pattern.permute.xlu0 1
        %1390 = vperm.xlu0 %1389, %v251
        %v1391 = vpop.permute.xlu0 %1390
        %1393 = vset.pattern.permute.xlu0 1
        %1394 = vperm.xlu0 %1393, %v252
        %v1395 = vpop.permute.xlu0 %1394
        %1397 = vset.pattern.permute.xlu0 1
        %1398 = vperm.xlu0 %1397, %v253
        %v1399 = vpop.permute.xlu0 %1398
        %1401 = vset.pattern.permute.xlu0 1
        %1402 = vperm.xlu0 %1401, %v254
        %v1403 = vpop.permute.xlu0 %1402
        %1405 = vset.pattern.permute.xlu0 1
        %1406 = vperm.xlu0 %1405, %v255
        %v1407 = vpop.permute.xlu0 %1406
        %1409 = vset.pattern.permute.xlu0 1
        %1410 = vperm.xlu0 %1409, %v256
        %v1411 = vpop.permute.xlu0 %1410
        %1413 = vset.pattern.permute.xlu0 1
        %1414 = vperm.xlu0 %1413, %v257
        %v1415 = vpop.permute.xlu0 %1414
        %1417 = vset.pattern.permute.xlu0 1
        %1418 = vperm.xlu0 %1417, %v258
        %v1419 = vpop.permute.xlu0 %1418
        %1421 = vset.pattern.permute.xlu0 1
        %1422 = vperm.xlu0 %1421, %v259
        %v1423 = vpop.permute.xlu0 %1422
        %1425 = vset.pattern.permute.xlu0 1
        %1426 = vperm.xlu0 %1425, %v260
        %v1427 = vpop.permute.xlu0 %1426
        %1429 = vset.pattern.permute.xlu0 1
        %1430 = vperm.xlu0 %1429, %v261
        %v1431 = vpop.permute.xlu0 %1430
        %1433 = vset.pattern.permute.xlu0 1
        %1434 = vperm.xlu0 %1433, %v262
        %v1435 = vpop.permute.xlu0 %1434
        %1437 = vset.pattern.permute.xlu0 1
        %1438 = vperm.xlu0 %1437, %v263
        %v1439 = vpop.permute.xlu0 %1438
        %1441 = vset.pattern.permute.xlu0 1
        %1442 = vperm.xlu0 %1441, %v264
        %v1443 = vpop.permute.xlu0 %1442
        %1445 = vset.pattern.permute.xlu0 1
        %1446 = vperm.xlu0 %1445, %v265
        %v1447 = vpop.permute.xlu0 %1446
        %1449 = vset.pattern.permute.xlu0 1
        %1450 = vperm.xlu0 %1449, %v266
        %v1451 = vpop.permute.xlu0 %1450
        %1453 = vset.pattern.permute.xlu0 1
        %1454 = vperm.xlu0 %1453, %v267
        %v1455 = vpop.permute.xlu0 %1454
        %1457 = vset.pattern.permute.xlu0 1
        %1458 = vperm.xlu0 %1457, %v268
        %v1459 = vpop.permute.xlu0 %1458
        %1461 = vset.pattern.permute.xlu0 1
        %1462 = vperm.xlu0 %1461, %v269
        %v1463 = vpop.permute.xlu0 %1462
        %1465 = vset.pattern.permute.xlu0 1
        %1466 = vperm.xlu0 %1465, %v270
        %v1467 = vpop.permute.xlu0 %1466
        %1469 = vset.pattern.permute.xlu0 1
        %1470 = vperm.xlu0 %1469, %v271
        %v1471 = vpop.permute.xlu0 %1470
        %1473 = vset.pattern.permute.xlu0 1
        %1474 = vperm.xlu0 %1473, %v272
        %v1475 = vpop.permute.xlu0 %1474
        %1477 = vset.pattern.permute.xlu0 1
        %1478 = vperm.xlu0 %1477, %v273
        %v1479 = vpop.permute.xlu0 %1478
        %1481 = vset.pattern.permute.xlu0 1
        %1482 = vperm.xlu0 %1481, %v274
        %v1483 = vpop.permute.xlu0 %1482
        %1485 = vset.pattern.permute.xlu0 1
        %1486 = vperm.xlu0 %1485, %v275
        %v1487 = vpop.permute.xlu0 %1486
        %1489 = vset.pattern.permute.xlu0 1
        %1490 = vperm.xlu0 %1489, %v276
        %v1491 = vpop.permute.xlu0 %1490
        %1493 = vset.pattern.permute.xlu0 1
        %1494 = vperm.xlu0 %1493, %v277
        %v1495 = vpop.permute.xlu0 %1494
        %1497 = vset.pattern.permute.xlu0 1
        %1498 = vperm.xlu0 %1497, %v278
        %v1499 = vpop.permute.xlu0 %1498
        %1501 = vset.pattern.permute.xlu0 1
        %1502 = vperm.xlu0 %1501, %v279
        %v1503 = vpop.permute.xlu0 %1502
        %1505 = vset.pattern.permute.xlu0 1
        %1506 = vperm.xlu0 %1505, %v280
        %v1507 = vpop.permute.xlu0 %1506
        %1509 = vset.pattern.permute.xlu0 1
        %1510 = vperm.xlu0 %1509, %v281
        %v1511 = vpop.permute.xlu0 %1510
        %1513 = vset.pattern.permute.xlu0 1
        %1514 = vperm.xlu0 %1513, %v282
        %v1515 = vpop.permute.xlu0 %1514
        %1517 = vset.pattern.permute.xlu0 1
        %1518 = vperm.xlu0 %1517, %v283
        %v1519 = vpop.permute.xlu0 %1518
        %1521 = vset.pattern.permute.xlu0 1
        %1522 = vperm.xlu0 %1521, %v284
        %v1523 = vpop.permute.xlu0 %1522
        %1525 = vset.pattern.permute.xlu0 1
        %1526 = vperm.xlu0 %1525, %v285
        %v1527 = vpop.permute.xlu0 %1526
        %1529 = vset.pattern.permute.xlu0 1
        %1530 = vperm.xlu0 %1529, %v286
        %v1531 = vpop.permute.xlu0 %1530
        %1533 = vset.pattern.permute.xlu0 1
        %1534 = vperm.xlu0 %1533, %v287
        %v1535 = vpop.permute.xlu0 %1534
        %1537 = vset.pattern.permute.xlu0 1
        %1538 = vperm.xlu0 %1537, %v288
        %v1539 = vpop.permute.xlu0 %1538
        %1541 = vset.pattern.permute.xlu0 1
        %1542 = vperm.xlu0 %1541, %v289
        %v1543 = vpop.permute.xlu0 %1542
        %1545 = vset.pattern.permute.xlu0 1
        %1546 = vperm.xlu0 %1545, %v290
        %v1547 = vpop.permute.xlu0 %1546
        %1549 = vset.pattern.permute.xlu0 1
        %1550 = vperm.xlu0 %1549, %v291
        %v1551 = vpop.permute.xlu0 %1550
        %1553 = vset.pattern.permute.xlu0 1
        %1554 = vperm.xlu0 %1553, %v292
        %v1555 = vpop.permute.xlu0 %1554
        %1557 = vset.pattern.permute.xlu0 1
        %1558 = vperm.xlu0 %1557, %v293
        %v1559 = vpop.permute.xlu0 %1558
        %1561 = vset.pattern.permute.xlu0 1
        %1562 = vperm.xlu0 %1561, %v294
        %v1563 = vpop.permute.xlu0 %1562
        %1565 = vset.pattern.permute.xlu0 1
        %1566 = vperm.xlu0 %1565, %v295
        %v1567 = vpop.permute.xlu0 %1566
        %1569 = vset.pattern.permute.xlu0 1
        %1570 = vperm.xlu0 %1569, %v296
        %v1571 = vpop.permute.xlu0 %1570
        %1573 = vset.pattern.permute.xlu0 1
        %1574 = vperm.xlu0 %1573, %v297
        %v1575 = vpop.permute.xlu0 %1574
        %1577 = vset.pattern.permute.xlu0 1
        %1578 = vperm.xlu0 %1577, %v298
        %v1579 = vpop.permute.xlu0 %1578
        %1581 = vset.pattern.permute.xlu0 1
        %1582 = vperm.xlu0 %1581, %v299
        %v1583 = vpop.permute.xlu0 %1582
        %v1585 = vlaneseq
        %v1586 = vshrl.u32 %v1585, 7
        %v1587 = vsub.s32 1, %v1586
        %v1588 = vrot.slane %v300, %v1587
        %v1589 = vmul.f32 %v1075, %v1588
        %v1590 = vmul.f32 %v1079, %v1588
        %v1591 = vmul.f32 %v1083, %v1588
        %v1592 = vmul.f32 %v1087, %v1588
        %v1593 = vmul.f32 %v1091, %v1588
        %v1594 = vmul.f32 %v1095, %v1588
        %v1595 = vmul.f32 %v1099, %v1588
        %v1596 = vmul.f32 %v1103, %v1588
        %v1597 = vmul.f32 %v1107, %v1588
        %v1598 = vmul.f32 %v1111, %v1588
        %v1599 = vmul.f32 %v1115, %v1588
        %v1600 = vmul.f32 %v1119, %v1588
        %v1601 = vmul.f32 %v1123, %v1588
        %v1602 = vmul.f32 %v1127, %v1588
        %v1603 = vmul.f32 %v1131, %v1588
        %v1604 = vmul.f32 %v1135, %v1588
        %v1605 = vmul.f32 %v1139, %v1588
        %v1606 = vmul.f32 %v1143, %v1588
        %v1607 = vmul.f32 %v1147, %v1588
        %v1608 = vmul.f32 %v1151, %v1588
        %v1609 = vmul.f32 %v1155, %v1588
        %v1610 = vmul.f32 %v1159, %v1588
        %v1611 = vmul.f32 %v1163, %v1588
        %v1612 = vmul.f32 %v1167, %v1588
        %v1613 = vmul.f32 %v1171, %v1588
        %v1614 = vmul.f32 %v1175, %v1588
        %v1615 = vmul.f32 %v1179, %v1588
        %v1616 = vmul.f32 %v1183, %v1588
        %v1617 = vmul.f32 %v1187, %v1588
        %v1618 = vmul.f32 %v1191, %v1588
        %v1619 = vmul.f32 %v1195, %v1588
        %v1620 = vmul.f32 %v1199, %v1588
        %v1621 = vmul.f32 %v1203, %v1588
        %v1622 = vmul.f32 %v1207, %v1588
        %v1623 = vmul.f32 %v1211, %v1588
        %v1624 = vmul.f32 %v1215, %v1588
        %v1625 = vmul.f32 %v1219, %v1588
        %v1626 = vmul.f32 %v1223, %v1588
        %v1627 = vmul.f32 %v1227, %v1588
        %v1628 = vmul.f32 %v1231, %v1588
        %v1629 = vmul.f32 %v1235, %v1588
        %v1630 = vmul.f32 %v1239, %v1588
        %v1631 = vmul.f32 %v1243, %v1588
        %v1632 = vmul.f32 %v1247, %v1588
        %v1633 = vmul.f32 %v1251, %v1588
        %v1634 = vmul.f32 %v1255, %v1588
        %v1635 = vmul.f32 %v1259, %v1588
        %v1636 = vmul.f32 %v1263, %v1588
        %v1637 = vmul.f32 %v1267, %v1588
        %v1638 = vmul.f32 %v1271, %v1588
        %v1639 = vmul.f32 %v1275, %v1588
        %v1640 = vmul.f32 %v1279, %v1588
        %v1641 = vmul.f32 %v1283, %v1588
        %v1642 = vmul.f32 %v1287, %v1588
        %v1643 = vmul.f32 %v1291, %v1588
        %v1644 = vmul.f32 %v1295, %v1588
        %v1645 = vmul.f32 %v1299, %v1588
        %v1646 = vmul.f32 %v1303, %v1588
        %v1647 = vmul.f32 %v1307, %v1588
        %v1648 = vmul.f32 %v1311, %v1588
        %v1649 = vmul.f32 %v1315, %v1588
        %v1650 = vmul.f32 %v1319, %v1588
        %v1651 = vmul.f32 %v1323, %v1588
        %v1652 = vmul.f32 %v1327, %v1588
        %v1653 = vmul.f32 %v1331, %v1588
        %v1654 = vmul.f32 %v1335, %v1588
        %v1655 = vmul.f32 %v1339, %v1588
        %v1656 = vmul.f32 %v1343, %v1588
        %v1657 = vmul.f32 %v1347, %v1588
        %v1658 = vmul.f32 %v1351, %v1588
        %v1659 = vmul.f32 %v1355, %v1588
        %v1660 = vmul.f32 %v1359, %v1588
        %v1661 = vmul.f32 %v1363, %v1588
        %v1662 = vmul.f32 %v1367, %v1588
        %v1663 = vmul.f32 %v1371, %v1588
        %v1664 = vmul.f32 %v1375, %v1588
        %v1665 = vmul.f32 %v1379, %v1588
        %v1666 = vmul.f32 %v1383, %v1588
        %v1667 = vmul.f32 %v1387, %v1588
        %v1668 = vmul.f32 %v1391, %v1588
        %v1669 = vmul.f32 %v1395, %v1588
        %v1670 = vmul.f32 %v1399, %v1588
        %v1671 = vmul.f32 %v1403, %v1588
        %v1672 = vmul.f32 %v1407, %v1588
        %v1673 = vmul.f32 %v1411, %v1588
        %v1674 = vmul.f32 %v1415, %v1588
        %v1675 = vmul.f32 %v1419, %v1588
        %v1676 = vmul.f32 %v1423, %v1588
        %v1677 = vmul.f32 %v1427, %v1588
        %v1678 = vmul.f32 %v1431, %v1588
        %v1679 = vmul.f32 %v1435, %v1588
        %v1680 = vmul.f32 %v1439, %v1588
        %v1681 = vmul.f32 %v1443, %v1588
        %v1682 = vmul.f32 %v1447, %v1588
        %v1683 = vmul.f32 %v1451, %v1588
        %v1684 = vmul.f32 %v1455, %v1588
        %v1685 = vmul.f32 %v1459, %v1588
        %v1686 = vmul.f32 %v1463, %v1588
        %v1687 = vmul.f32 %v1467, %v1588
        %v1688 = vmul.f32 %v1471, %v1588
        %v1689 = vmul.f32 %v1475, %v1588
        %v1690 = vmul.f32 %v1479, %v1588
        %v1691 = vmul.f32 %v1483, %v1588
        %v1692 = vmul.f32 %v1487, %v1588
        %v1693 = vmul.f32 %v1491, %v1588
        %v1694 = vmul.f32 %v1495, %v1588
        %v1695 = vmul.f32 %v1499, %v1588
        %v1696 = vmul.f32 %v1503, %v1588
        %v1697 = vmul.f32 %v1507, %v1588
        %v1698 = vmul.f32 %v1511, %v1588
        %v1699 = vmul.f32 %v1515, %v1588
        %v1700 = vmul.f32 %v1519, %v1588
        %v1701 = vmul.f32 %v1523, %v1588
        %v1702 = vmul.f32 %v1527, %v1588
        %v1703 = vmul.f32 %v1531, %v1588
        %v1704 = vmul.f32 %v1535, %v1588
        %v1705 = vmul.f32 %v1539, %v1588
        %v1706 = vmul.f32 %v1543, %v1588
        %v1707 = vmul.f32 %v1547, %v1588
        %v1708 = vmul.f32 %v1551, %v1588
        %v1709 = vmul.f32 %v1555, %v1588
        %v1710 = vmul.f32 %v1559, %v1588
        %v1711 = vmul.f32 %v1563, %v1588
        %v1712 = vmul.f32 %v1567, %v1588
        %v1713 = vmul.f32 %v1571, %v1588
        %v1714 = vmul.f32 %v1575, %v1588
        %v1715 = vmul.f32 %v1579, %v1588
        %v1716 = vmul.f32 %v1583, %v1588
        %v1717 = vadd.f32 %v945, %v1589
        %v1718 = vadd.f32 %v946, %v1590
        %v1719 = vadd.f32 %v947, %v1591
        %v1720 = vadd.f32 %v948, %v1592
        %v1721 = vadd.f32 %v949, %v1593
        %v1722 = vadd.f32 %v950, %v1594
        %v1723 = vadd.f32 %v951, %v1595
        %v1724 = vadd.f32 %v952, %v1596
        %v1725 = vadd.f32 %v953, %v1597
        %v1726 = vadd.f32 %v954, %v1598
        %v1727 = vadd.f32 %v955, %v1599
        %v1728 = vadd.f32 %v956, %v1600
        %v1729 = vadd.f32 %v957, %v1601
        %v1730 = vadd.f32 %v958, %v1602
        %v1731 = vadd.f32 %v959, %v1603
        %v1732 = vadd.f32 %v960, %v1604
        %v1733 = vadd.f32 %v961, %v1605
        %v1734 = vadd.f32 %v962, %v1606
        %v1735 = vadd.f32 %v963, %v1607
        %v1736 = vadd.f32 %v964, %v1608
        %v1737 = vadd.f32 %v965, %v1609
        %v1738 = vadd.f32 %v966, %v1610
        %v1739 = vadd.f32 %v967, %v1611
        %v1740 = vadd.f32 %v968, %v1612
        %v1741 = vadd.f32 %v969, %v1613
        %v1742 = vadd.f32 %v970, %v1614
        %v1743 = vadd.f32 %v971, %v1615
        %v1744 = vadd.f32 %v972, %v1616
        %v1745 = vadd.f32 %v973, %v1617
        %v1746 = vadd.f32 %v974, %v1618
        %v1747 = vadd.f32 %v975, %v1619
        %v1748 = vadd.f32 %v976, %v1620
        %v1749 = vadd.f32 %v977, %v1621
        %v1750 = vadd.f32 %v978, %v1622
        %v1751 = vadd.f32 %v979, %v1623
        %v1752 = vadd.f32 %v980, %v1624
        %v1753 = vadd.f32 %v981, %v1625
        %v1754 = vadd.f32 %v982, %v1626
        %v1755 = vadd.f32 %v983, %v1627
        %v1756 = vadd.f32 %v984, %v1628
        %v1757 = vadd.f32 %v985, %v1629
        %v1758 = vadd.f32 %v986, %v1630
        %v1759 = vadd.f32 %v987, %v1631
        %v1760 = vadd.f32 %v988, %v1632
        %v1761 = vadd.f32 %v989, %v1633
        %v1762 = vadd.f32 %v990, %v1634
        %v1763 = vadd.f32 %v991, %v1635
        %v1764 = vadd.f32 %v992, %v1636
        %v1765 = vadd.f32 %v993, %v1637
        %v1766 = vadd.f32 %v994, %v1638
        %v1767 = vadd.f32 %v995, %v1639
        %v1768 = vadd.f32 %v996, %v1640
        %v1769 = vadd.f32 %v997, %v1641
        %v1770 = vadd.f32 %v998, %v1642
        %v1771 = vadd.f32 %v999, %v1643
        %v1772 = vadd.f32 %v1000, %v1644
        %v1773 = vadd.f32 %v1001, %v1645
        %v1774 = vadd.f32 %v1002, %v1646
        %v1775 = vadd.f32 %v1003, %v1647
        %v1776 = vadd.f32 %v1004, %v1648
        %v1777 = vadd.f32 %v1005, %v1649
        %v1778 = vadd.f32 %v1006, %v1650
        %v1779 = vadd.f32 %v1007, %v1651
        %v1780 = vadd.f32 %v1008, %v1652
        %v1781 = vadd.f32 %v1009, %v1653
        %v1782 = vadd.f32 %v1010, %v1654
        %v1783 = vadd.f32 %v1011, %v1655
        %v1784 = vadd.f32 %v1012, %v1656
        %v1785 = vadd.f32 %v1013, %v1657
        %v1786 = vadd.f32 %v1014, %v1658
        %v1787 = vadd.f32 %v1015, %v1659
        %v1788 = vadd.f32 %v1016, %v1660
        %v1789 = vadd.f32 %v1017, %v1661
        %v1790 = vadd.f32 %v1018, %v1662
        %v1791 = vadd.f32 %v1019, %v1663
        %v1792 = vadd.f32 %v1020, %v1664
        %v1793 = vadd.f32 %v1021, %v1665
        %v1794 = vadd.f32 %v1022, %v1666
        %v1795 = vadd.f32 %v1023, %v1667
        %v1796 = vadd.f32 %v1024, %v1668
        %v1797 = vadd.f32 %v1025, %v1669
        %v1798 = vadd.f32 %v1026, %v1670
        %v1799 = vadd.f32 %v1027, %v1671
        %v1800 = vadd.f32 %v1028, %v1672
        %v1801 = vadd.f32 %v1029, %v1673
        %v1802 = vadd.f32 %v1030, %v1674
        %v1803 = vadd.f32 %v1031, %v1675
        %v1804 = vadd.f32 %v1032, %v1676
        %v1805 = vadd.f32 %v1033, %v1677
        %v1806 = vadd.f32 %v1034, %v1678
        %v1807 = vadd.f32 %v1035, %v1679
        %v1808 = vadd.f32 %v1036, %v1680
        %v1809 = vadd.f32 %v1037, %v1681
        %v1810 = vadd.f32 %v1038, %v1682
        %v1811 = vadd.f32 %v1039, %v1683
        %v1812 = vadd.f32 %v1040, %v1684
        %v1813 = vadd.f32 %v1041, %v1685
        %v1814 = vadd.f32 %v1042, %v1686
        %v1815 = vadd.f32 %v1043, %v1687
        %v1816 = vadd.f32 %v1044, %v1688
        %v1817 = vadd.f32 %v1045, %v1689
        %v1818 = vadd.f32 %v1046, %v1690
        %v1819 = vadd.f32 %v1047, %v1691
        %v1820 = vadd.f32 %v1048, %v1692
        %v1821 = vadd.f32 %v1049, %v1693
        %v1822 = vadd.f32 %v1050, %v1694
        %v1823 = vadd.f32 %v1051, %v1695
        %v1824 = vadd.f32 %v1052, %v1696
        %v1825 = vadd.f32 %v1053, %v1697
        %v1826 = vadd.f32 %v1054, %v1698
        %v1827 = vadd.f32 %v1055, %v1699
        %v1828 = vadd.f32 %v1056, %v1700
        %v1829 = vadd.f32 %v1057, %v1701
        %v1830 = vadd.f32 %v1058, %v1702
        %v1831 = vadd.f32 %v1059, %v1703
        %v1832 = vadd.f32 %v1060, %v1704
        %v1833 = vadd.f32 %v1061, %v1705
        %v1834 = vadd.f32 %v1062, %v1706
        %v1835 = vadd.f32 %v1063, %v1707
        %v1836 = vadd.f32 %v1064, %v1708
        %v1837 = vadd.f32 %v1065, %v1709
        %v1838 = vadd.f32 %v1066, %v1710
        %v1839 = vadd.f32 %v1067, %v1711
        %v1840 = vadd.f32 %v1068, %v1712
        %v1841 = vadd.f32 %v1069, %v1713
        %v1842 = vadd.f32 %v1070, %v1714
        %v1843 = vadd.f32 %v1071, %v1715
        %v1844 = vadd.f32 %v1072, %v1716
        %1845 = vset.pattern.permute.xlu0 2
        %1846 = vperm.xlu0 %1845, %v172
        %v1847 = vpop.permute.xlu0 %1846
        %1849 = vset.pattern.permute.xlu0 2
        %1850 = vperm.xlu0 %1849, %v173
        %v1851 = vpop.permute.xlu0 %1850
        %1853 = vset.pattern.permute.xlu0 2
        %1854 = vperm.xlu0 %1853, %v174
        %v1855 = vpop.permute.xlu0 %1854
        %1857 = vset.pattern.permute.xlu0 2
        %1858 = vperm.xlu0 %1857, %v175
        %v1859 = vpop.permute.xlu0 %1858
        %1861 = vset.pattern.permute.xlu0 2
        %1862 = vperm.xlu0 %1861, %v176
        %v1863 = vpop.permute.xlu0 %1862
        %1865 = vset.pattern.permute.xlu0 2
        %1866 = vperm.xlu0 %1865, %v177
        %v1867 = vpop.permute.xlu0 %1866
        %1869 = vset.pattern.permute.xlu0 2
        %1870 = vperm.xlu0 %1869, %v178
        %v1871 = vpop.permute.xlu0 %1870
        %1873 = vset.pattern.permute.xlu0 2
        %1874 = vperm.xlu0 %1873, %v179
        %v1875 = vpop.permute.xlu0 %1874
        %1877 = vset.pattern.permute.xlu0 2
        %1878 = vperm.xlu0 %1877, %v180
        %v1879 = vpop.permute.xlu0 %1878
        %1881 = vset.pattern.permute.xlu0 2
        %1882 = vperm.xlu0 %1881, %v181
        %v1883 = vpop.permute.xlu0 %1882
        %1885 = vset.pattern.permute.xlu0 2
        %1886 = vperm.xlu0 %1885, %v182
        %v1887 = vpop.permute.xlu0 %1886
        %1889 = vset.pattern.permute.xlu0 2
        %1890 = vperm.xlu0 %1889, %v183
        %v1891 = vpop.permute.xlu0 %1890
        %1893 = vset.pattern.permute.xlu0 2
        %1894 = vperm.xlu0 %1893, %v184
        %v1895 = vpop.permute.xlu0 %1894
        %1897 = vset.pattern.permute.xlu0 2
        %1898 = vperm.xlu0 %1897, %v185
        %v1899 = vpop.permute.xlu0 %1898
        %1901 = vset.pattern.permute.xlu0 2
        %1902 = vperm.xlu0 %1901, %v186
        %v1903 = vpop.permute.xlu0 %1902
        %1905 = vset.pattern.permute.xlu0 2
        %1906 = vperm.xlu0 %1905, %v187
        %v1907 = vpop.permute.xlu0 %1906
        %1909 = vset.pattern.permute.xlu0 2
        %1910 = vperm.xlu0 %1909, %v188
        %v1911 = vpop.permute.xlu0 %1910
        %1913 = vset.pattern.permute.xlu0 2
        %1914 = vperm.xlu0 %1913, %v189
        %v1915 = vpop.permute.xlu0 %1914
        %1917 = vset.pattern.permute.xlu0 2
        %1918 = vperm.xlu0 %1917, %v190
        %v1919 = vpop.permute.xlu0 %1918
        %1921 = vset.pattern.permute.xlu0 2
        %1922 = vperm.xlu0 %1921, %v191
        %v1923 = vpop.permute.xlu0 %1922
        %1925 = vset.pattern.permute.xlu0 2
        %1926 = vperm.xlu0 %1925, %v192
        %v1927 = vpop.permute.xlu0 %1926
        %1929 = vset.pattern.permute.xlu0 2
        %1930 = vperm.xlu0 %1929, %v193
        %v1931 = vpop.permute.xlu0 %1930
        %1933 = vset.pattern.permute.xlu0 2
        %1934 = vperm.xlu0 %1933, %v194
        %v1935 = vpop.permute.xlu0 %1934
        %1937 = vset.pattern.permute.xlu0 2
        %1938 = vperm.xlu0 %1937, %v195
        %v1939 = vpop.permute.xlu0 %1938
        %1941 = vset.pattern.permute.xlu0 2
        %1942 = vperm.xlu0 %1941, %v196
        %v1943 = vpop.permute.xlu0 %1942
        %1945 = vset.pattern.permute.xlu0 2
        %1946 = vperm.xlu0 %1945, %v197
        %v1947 = vpop.permute.xlu0 %1946
        %1949 = vset.pattern.permute.xlu0 2
        %1950 = vperm.xlu0 %1949, %v198
        %v1951 = vpop.permute.xlu0 %1950
        %1953 = vset.pattern.permute.xlu0 2
        %1954 = vperm.xlu0 %1953, %v199
        %v1955 = vpop.permute.xlu0 %1954
        %1957 = vset.pattern.permute.xlu0 2
        %1958 = vperm.xlu0 %1957, %v200
        %v1959 = vpop.permute.xlu0 %1958
        %1961 = vset.pattern.permute.xlu0 2
        %1962 = vperm.xlu0 %1961, %v201
        %v1963 = vpop.permute.xlu0 %1962
        %1965 = vset.pattern.permute.xlu0 2
        %1966 = vperm.xlu0 %1965, %v202
        %v1967 = vpop.permute.xlu0 %1966
        %1969 = vset.pattern.permute.xlu0 2
        %1970 = vperm.xlu0 %1969, %v203
        %v1971 = vpop.permute.xlu0 %1970
        %1973 = vset.pattern.permute.xlu0 2
        %1974 = vperm.xlu0 %1973, %v204
        %v1975 = vpop.permute.xlu0 %1974
        %1977 = vset.pattern.permute.xlu0 2
        %1978 = vperm.xlu0 %1977, %v205
        %v1979 = vpop.permute.xlu0 %1978
        %1981 = vset.pattern.permute.xlu0 2
        %1982 = vperm.xlu0 %1981, %v206
        %v1983 = vpop.permute.xlu0 %1982
        %1985 = vset.pattern.permute.xlu0 2
        %1986 = vperm.xlu0 %1985, %v207
        %v1987 = vpop.permute.xlu0 %1986
        %1989 = vset.pattern.permute.xlu0 2
        %1990 = vperm.xlu0 %1989, %v208
        %v1991 = vpop.permute.xlu0 %1990
        %1993 = vset.pattern.permute.xlu0 2
        %1994 = vperm.xlu0 %1993, %v209
        %v1995 = vpop.permute.xlu0 %1994
        %1997 = vset.pattern.permute.xlu0 2
        %1998 = vperm.xlu0 %1997, %v210
        %v1999 = vpop.permute.xlu0 %1998
        %2001 = vset.pattern.permute.xlu0 2
        %2002 = vperm.xlu0 %2001, %v211
        %v2003 = vpop.permute.xlu0 %2002
        %2005 = vset.pattern.permute.xlu0 2
        %2006 = vperm.xlu0 %2005, %v212
        %v2007 = vpop.permute.xlu0 %2006
        %2009 = vset.pattern.permute.xlu0 2
        %2010 = vperm.xlu0 %2009, %v213
        %v2011 = vpop.permute.xlu0 %2010
        %2013 = vset.pattern.permute.xlu0 2
        %2014 = vperm.xlu0 %2013, %v214
        %v2015 = vpop.permute.xlu0 %2014
        %2017 = vset.pattern.permute.xlu0 2
        %2018 = vperm.xlu0 %2017, %v215
        %v2019 = vpop.permute.xlu0 %2018
        %2021 = vset.pattern.permute.xlu0 2
        %2022 = vperm.xlu0 %2021, %v216
        %v2023 = vpop.permute.xlu0 %2022
        %2025 = vset.pattern.permute.xlu0 2
        %2026 = vperm.xlu0 %2025, %v217
        %v2027 = vpop.permute.xlu0 %2026
        %2029 = vset.pattern.permute.xlu0 2
        %2030 = vperm.xlu0 %2029, %v218
        %v2031 = vpop.permute.xlu0 %2030
        %2033 = vset.pattern.permute.xlu0 2
        %2034 = vperm.xlu0 %2033, %v219
        %v2035 = vpop.permute.xlu0 %2034
        %2037 = vset.pattern.permute.xlu0 2
        %2038 = vperm.xlu0 %2037, %v220
        %v2039 = vpop.permute.xlu0 %2038
        %2041 = vset.pattern.permute.xlu0 2
        %2042 = vperm.xlu0 %2041, %v221
        %v2043 = vpop.permute.xlu0 %2042
        %2045 = vset.pattern.permute.xlu0 2
        %2046 = vperm.xlu0 %2045, %v222
        %v2047 = vpop.permute.xlu0 %2046
        %2049 = vset.pattern.permute.xlu0 2
        %2050 = vperm.xlu0 %2049, %v223
        %v2051 = vpop.permute.xlu0 %2050
        %2053 = vset.pattern.permute.xlu0 2
        %2054 = vperm.xlu0 %2053, %v224
        %v2055 = vpop.permute.xlu0 %2054
        %2057 = vset.pattern.permute.xlu0 2
        %2058 = vperm.xlu0 %2057, %v225
        %v2059 = vpop.permute.xlu0 %2058
        %2061 = vset.pattern.permute.xlu0 2
        %2062 = vperm.xlu0 %2061, %v226
        %v2063 = vpop.permute.xlu0 %2062
        %2065 = vset.pattern.permute.xlu0 2
        %2066 = vperm.xlu0 %2065, %v227
        %v2067 = vpop.permute.xlu0 %2066
        %2069 = vset.pattern.permute.xlu0 2
        %2070 = vperm.xlu0 %2069, %v228
        %v2071 = vpop.permute.xlu0 %2070
        %2073 = vset.pattern.permute.xlu0 2
        %2074 = vperm.xlu0 %2073, %v229
        %v2075 = vpop.permute.xlu0 %2074
        %2077 = vset.pattern.permute.xlu0 2
        %2078 = vperm.xlu0 %2077, %v230
        %v2079 = vpop.permute.xlu0 %2078
        %2081 = vset.pattern.permute.xlu0 2
        %2082 = vperm.xlu0 %2081, %v231
        %v2083 = vpop.permute.xlu0 %2082
        %2085 = vset.pattern.permute.xlu0 2
        %2086 = vperm.xlu0 %2085, %v232
        %v2087 = vpop.permute.xlu0 %2086
        %2089 = vset.pattern.permute.xlu0 2
        %2090 = vperm.xlu0 %2089, %v233
        %v2091 = vpop.permute.xlu0 %2090
        %2093 = vset.pattern.permute.xlu0 2
        %2094 = vperm.xlu0 %2093, %v234
        %v2095 = vpop.permute.xlu0 %2094
        %2097 = vset.pattern.permute.xlu0 2
        %2098 = vperm.xlu0 %2097, %v235
        %v2099 = vpop.permute.xlu0 %2098
        %2101 = vset.pattern.permute.xlu0 2
        %2102 = vperm.xlu0 %2101, %v236
        %v2103 = vpop.permute.xlu0 %2102
        %2105 = vset.pattern.permute.xlu0 2
        %2106 = vperm.xlu0 %2105, %v237
        %v2107 = vpop.permute.xlu0 %2106
        %2109 = vset.pattern.permute.xlu0 2
        %2110 = vperm.xlu0 %2109, %v238
        %v2111 = vpop.permute.xlu0 %2110
        %2113 = vset.pattern.permute.xlu0 2
        %2114 = vperm.xlu0 %2113, %v239
        %v2115 = vpop.permute.xlu0 %2114
        %2117 = vset.pattern.permute.xlu0 2
        %2118 = vperm.xlu0 %2117, %v240
        %v2119 = vpop.permute.xlu0 %2118
        %2121 = vset.pattern.permute.xlu0 2
        %2122 = vperm.xlu0 %2121, %v241
        %v2123 = vpop.permute.xlu0 %2122
        %2125 = vset.pattern.permute.xlu0 2
        %2126 = vperm.xlu0 %2125, %v242
        %v2127 = vpop.permute.xlu0 %2126
        %2129 = vset.pattern.permute.xlu0 2
        %2130 = vperm.xlu0 %2129, %v243
        %v2131 = vpop.permute.xlu0 %2130
        %2133 = vset.pattern.permute.xlu0 2
        %2134 = vperm.xlu0 %2133, %v244
        %v2135 = vpop.permute.xlu0 %2134
        %2137 = vset.pattern.permute.xlu0 2
        %2138 = vperm.xlu0 %2137, %v245
        %v2139 = vpop.permute.xlu0 %2138
        %2141 = vset.pattern.permute.xlu0 2
        %2142 = vperm.xlu0 %2141, %v246
        %v2143 = vpop.permute.xlu0 %2142
        %2145 = vset.pattern.permute.xlu0 2
        %2146 = vperm.xlu0 %2145, %v247
        %v2147 = vpop.permute.xlu0 %2146
        %2149 = vset.pattern.permute.xlu0 2
        %2150 = vperm.xlu0 %2149, %v248
        %v2151 = vpop.permute.xlu0 %2150
        %2153 = vset.pattern.permute.xlu0 2
        %2154 = vperm.xlu0 %2153, %v249
        %v2155 = vpop.permute.xlu0 %2154
        %2157 = vset.pattern.permute.xlu0 2
        %2158 = vperm.xlu0 %2157, %v250
        %v2159 = vpop.permute.xlu0 %2158
        %2161 = vset.pattern.permute.xlu0 2
        %2162 = vperm.xlu0 %2161, %v251
        %v2163 = vpop.permute.xlu0 %2162
        %2165 = vset.pattern.permute.xlu0 2
        %2166 = vperm.xlu0 %2165, %v252
        %v2167 = vpop.permute.xlu0 %2166
        %2169 = vset.pattern.permute.xlu0 2
        %2170 = vperm.xlu0 %2169, %v253
        %v2171 = vpop.permute.xlu0 %2170
        %2173 = vset.pattern.permute.xlu0 2
        %2174 = vperm.xlu0 %2173, %v254
        %v2175 = vpop.permute.xlu0 %2174
        %2177 = vset.pattern.permute.xlu0 2
        %2178 = vperm.xlu0 %2177, %v255
        %v2179 = vpop.permute.xlu0 %2178
        %2181 = vset.pattern.permute.xlu0 2
        %2182 = vperm.xlu0 %2181, %v256
        %v2183 = vpop.permute.xlu0 %2182
        %2185 = vset.pattern.permute.xlu0 2
        %2186 = vperm.xlu0 %2185, %v257
        %v2187 = vpop.permute.xlu0 %2186
        %2189 = vset.pattern.permute.xlu0 2
        %2190 = vperm.xlu0 %2189, %v258
        %v2191 = vpop.permute.xlu0 %2190
        %2193 = vset.pattern.permute.xlu0 2
        %2194 = vperm.xlu0 %2193, %v259
        %v2195 = vpop.permute.xlu0 %2194
        %2197 = vset.pattern.permute.xlu0 2
        %2198 = vperm.xlu0 %2197, %v260
        %v2199 = vpop.permute.xlu0 %2198
        %2201 = vset.pattern.permute.xlu0 2
        %2202 = vperm.xlu0 %2201, %v261
        %v2203 = vpop.permute.xlu0 %2202
        %2205 = vset.pattern.permute.xlu0 2
        %2206 = vperm.xlu0 %2205, %v262
        %v2207 = vpop.permute.xlu0 %2206
        %2209 = vset.pattern.permute.xlu0 2
        %2210 = vperm.xlu0 %2209, %v263
        %v2211 = vpop.permute.xlu0 %2210
        %2213 = vset.pattern.permute.xlu0 2
        %2214 = vperm.xlu0 %2213, %v264
        %v2215 = vpop.permute.xlu0 %2214
        %2217 = vset.pattern.permute.xlu0 2
        %2218 = vperm.xlu0 %2217, %v265
        %v2219 = vpop.permute.xlu0 %2218
        %2221 = vset.pattern.permute.xlu0 2
        %2222 = vperm.xlu0 %2221, %v266
        %v2223 = vpop.permute.xlu0 %2222
        %2225 = vset.pattern.permute.xlu0 2
        %2226 = vperm.xlu0 %2225, %v267
        %v2227 = vpop.permute.xlu0 %2226
        %2229 = vset.pattern.permute.xlu0 2
        %2230 = vperm.xlu0 %2229, %v268
        %v2231 = vpop.permute.xlu0 %2230
        %2233 = vset.pattern.permute.xlu0 2
        %2234 = vperm.xlu0 %2233, %v269
        %v2235 = vpop.permute.xlu0 %2234
        %2237 = vset.pattern.permute.xlu0 2
        %2238 = vperm.xlu0 %2237, %v270
        %v2239 = vpop.permute.xlu0 %2238
        %2241 = vset.pattern.permute.xlu0 2
        %2242 = vperm.xlu0 %2241, %v271
        %v2243 = vpop.permute.xlu0 %2242
        %2245 = vset.pattern.permute.xlu0 2
        %2246 = vperm.xlu0 %2245, %v272
        %v2247 = vpop.permute.xlu0 %2246
        %2249 = vset.pattern.permute.xlu0 2
        %2250 = vperm.xlu0 %2249, %v273
        %v2251 = vpop.permute.xlu0 %2250
        %2253 = vset.pattern.permute.xlu0 2
        %2254 = vperm.xlu0 %2253, %v274
        %v2255 = vpop.permute.xlu0 %2254
        %2257 = vset.pattern.permute.xlu0 2
        %2258 = vperm.xlu0 %2257, %v275
        %v2259 = vpop.permute.xlu0 %2258
        %2261 = vset.pattern.permute.xlu0 2
        %2262 = vperm.xlu0 %2261, %v276
        %v2263 = vpop.permute.xlu0 %2262
        %2265 = vset.pattern.permute.xlu0 2
        %2266 = vperm.xlu0 %2265, %v277
        %v2267 = vpop.permute.xlu0 %2266
        %2269 = vset.pattern.permute.xlu0 2
        %2270 = vperm.xlu0 %2269, %v278
        %v2271 = vpop.permute.xlu0 %2270
        %2273 = vset.pattern.permute.xlu0 2
        %2274 = vperm.xlu0 %2273, %v279
        %v2275 = vpop.permute.xlu0 %2274
        %2277 = vset.pattern.permute.xlu0 2
        %2278 = vperm.xlu0 %2277, %v280
        %v2279 = vpop.permute.xlu0 %2278
        %2281 = vset.pattern.permute.xlu0 2
        %2282 = vperm.xlu0 %2281, %v281
        %v2283 = vpop.permute.xlu0 %2282
        %2285 = vset.pattern.permute.xlu0 2
        %2286 = vperm.xlu0 %2285, %v282
        %v2287 = vpop.permute.xlu0 %2286
        %2289 = vset.pattern.permute.xlu0 2
        %2290 = vperm.xlu0 %2289, %v283
        %v2291 = vpop.permute.xlu0 %2290
        %2293 = vset.pattern.permute.xlu0 2
        %2294 = vperm.xlu0 %2293, %v284
        %v2295 = vpop.permute.xlu0 %2294
        %2297 = vset.pattern.permute.xlu0 2
        %2298 = vperm.xlu0 %2297, %v285
        %v2299 = vpop.permute.xlu0 %2298
        %2301 = vset.pattern.permute.xlu0 2
        %2302 = vperm.xlu0 %2301, %v286
        %v2303 = vpop.permute.xlu0 %2302
        %2305 = vset.pattern.permute.xlu0 2
        %2306 = vperm.xlu0 %2305, %v287
        %v2307 = vpop.permute.xlu0 %2306
        %2309 = vset.pattern.permute.xlu0 2
        %2310 = vperm.xlu0 %2309, %v288
        %v2311 = vpop.permute.xlu0 %2310
        %2313 = vset.pattern.permute.xlu0 2
        %2314 = vperm.xlu0 %2313, %v289
        %v2315 = vpop.permute.xlu0 %2314
        %2317 = vset.pattern.permute.xlu0 2
        %2318 = vperm.xlu0 %2317, %v290
        %v2319 = vpop.permute.xlu0 %2318
        %2321 = vset.pattern.permute.xlu0 2
        %2322 = vperm.xlu0 %2321, %v291
        %v2323 = vpop.permute.xlu0 %2322
        %2325 = vset.pattern.permute.xlu0 2
        %2326 = vperm.xlu0 %2325, %v292
        %v2327 = vpop.permute.xlu0 %2326
        %2329 = vset.pattern.permute.xlu0 2
        %2330 = vperm.xlu0 %2329, %v293
        %v2331 = vpop.permute.xlu0 %2330
        %2333 = vset.pattern.permute.xlu0 2
        %2334 = vperm.xlu0 %2333, %v294
        %v2335 = vpop.permute.xlu0 %2334
        %2337 = vset.pattern.permute.xlu0 2
        %2338 = vperm.xlu0 %2337, %v295
        %v2339 = vpop.permute.xlu0 %2338
        %2341 = vset.pattern.permute.xlu0 2
        %2342 = vperm.xlu0 %2341, %v296
        %v2343 = vpop.permute.xlu0 %2342
        %2345 = vset.pattern.permute.xlu0 2
        %2346 = vperm.xlu0 %2345, %v297
        %v2347 = vpop.permute.xlu0 %2346
        %2349 = vset.pattern.permute.xlu0 2
        %2350 = vperm.xlu0 %2349, %v298
        %v2351 = vpop.permute.xlu0 %2350
        %2353 = vset.pattern.permute.xlu0 2
        %2354 = vperm.xlu0 %2353, %v299
        %v2355 = vpop.permute.xlu0 %2354
        %v2357 = vlaneseq
        %v2358 = vshrl.u32 %v2357, 7
        %v2359 = vsub.s32 2, %v2358
        %v2360 = vrot.slane %v300, %v2359
        %v2361 = vmul.f32 %v1847, %v2360
        %v2362 = vmul.f32 %v1851, %v2360
        %v2363 = vmul.f32 %v1855, %v2360
        %v2364 = vmul.f32 %v1859, %v2360
        %v2365 = vmul.f32 %v1863, %v2360
        %v2366 = vmul.f32 %v1867, %v2360
        %v2367 = vmul.f32 %v1871, %v2360
        %v2368 = vmul.f32 %v1875, %v2360
        %v2369 = vmul.f32 %v1879, %v2360
        %v2370 = vmul.f32 %v1883, %v2360
        %v2371 = vmul.f32 %v1887, %v2360
        %v2372 = vmul.f32 %v1891, %v2360
        %v2373 = vmul.f32 %v1895, %v2360
        %v2374 = vmul.f32 %v1899, %v2360
        %v2375 = vmul.f32 %v1903, %v2360
        %v2376 = vmul.f32 %v1907, %v2360
        %v2377 = vmul.f32 %v1911, %v2360
        %v2378 = vmul.f32 %v1915, %v2360
        %v2379 = vmul.f32 %v1919, %v2360
        %v2380 = vmul.f32 %v1923, %v2360
        %v2381 = vmul.f32 %v1927, %v2360
        %v2382 = vmul.f32 %v1931, %v2360
        %v2383 = vmul.f32 %v1935, %v2360
        %v2384 = vmul.f32 %v1939, %v2360
        %v2385 = vmul.f32 %v1943, %v2360
        %v2386 = vmul.f32 %v1947, %v2360
        %v2387 = vmul.f32 %v1951, %v2360
        %v2388 = vmul.f32 %v1955, %v2360
        %v2389 = vmul.f32 %v1959, %v2360
        %v2390 = vmul.f32 %v1963, %v2360
        %v2391 = vmul.f32 %v1967, %v2360
        %v2392 = vmul.f32 %v1971, %v2360
        %v2393 = vmul.f32 %v1975, %v2360
        %v2394 = vmul.f32 %v1979, %v2360
        %v2395 = vmul.f32 %v1983, %v2360
        %v2396 = vmul.f32 %v1987, %v2360
        %v2397 = vmul.f32 %v1991, %v2360
        %v2398 = vmul.f32 %v1995, %v2360
        %v2399 = vmul.f32 %v1999, %v2360
        %v2400 = vmul.f32 %v2003, %v2360
        %v2401 = vmul.f32 %v2007, %v2360
        %v2402 = vmul.f32 %v2011, %v2360
        %v2403 = vmul.f32 %v2015, %v2360
        %v2404 = vmul.f32 %v2019, %v2360
        %v2405 = vmul.f32 %v2023, %v2360
        %v2406 = vmul.f32 %v2027, %v2360
        %v2407 = vmul.f32 %v2031, %v2360
        %v2408 = vmul.f32 %v2035, %v2360
        %v2409 = vmul.f32 %v2039, %v2360
        %v2410 = vmul.f32 %v2043, %v2360
        %v2411 = vmul.f32 %v2047, %v2360
        %v2412 = vmul.f32 %v2051, %v2360
        %v2413 = vmul.f32 %v2055, %v2360
        %v2414 = vmul.f32 %v2059, %v2360
        %v2415 = vmul.f32 %v2063, %v2360
        %v2416 = vmul.f32 %v2067, %v2360
        %v2417 = vmul.f32 %v2071, %v2360
        %v2418 = vmul.f32 %v2075, %v2360
        %v2419 = vmul.f32 %v2079, %v2360
        %v2420 = vmul.f32 %v2083, %v2360
        %v2421 = vmul.f32 %v2087, %v2360
        %v2422 = vmul.f32 %v2091, %v2360
        %v2423 = vmul.f32 %v2095, %v2360
        %v2424 = vmul.f32 %v2099, %v2360
        %v2425 = vmul.f32 %v2103, %v2360
        %v2426 = vmul.f32 %v2107, %v2360
        %v2427 = vmul.f32 %v2111, %v2360
        %v2428 = vmul.f32 %v2115, %v2360
        %v2429 = vmul.f32 %v2119, %v2360
        %v2430 = vmul.f32 %v2123, %v2360
        %v2431 = vmul.f32 %v2127, %v2360
        %v2432 = vmul.f32 %v2131, %v2360
        %v2433 = vmul.f32 %v2135, %v2360
        %v2434 = vmul.f32 %v2139, %v2360
        %v2435 = vmul.f32 %v2143, %v2360
        %v2436 = vmul.f32 %v2147, %v2360
        %v2437 = vmul.f32 %v2151, %v2360
        %v2438 = vmul.f32 %v2155, %v2360
        %v2439 = vmul.f32 %v2159, %v2360
        %v2440 = vmul.f32 %v2163, %v2360
        %v2441 = vmul.f32 %v2167, %v2360
        %v2442 = vmul.f32 %v2171, %v2360
        %v2443 = vmul.f32 %v2175, %v2360
        %v2444 = vmul.f32 %v2179, %v2360
        %v2445 = vmul.f32 %v2183, %v2360
        %v2446 = vmul.f32 %v2187, %v2360
        %v2447 = vmul.f32 %v2191, %v2360
        %v2448 = vmul.f32 %v2195, %v2360
        %v2449 = vmul.f32 %v2199, %v2360
        %v2450 = vmul.f32 %v2203, %v2360
        %v2451 = vmul.f32 %v2207, %v2360
        %v2452 = vmul.f32 %v2211, %v2360
        %v2453 = vmul.f32 %v2215, %v2360
        %v2454 = vmul.f32 %v2219, %v2360
        %v2455 = vmul.f32 %v2223, %v2360
        %v2456 = vmul.f32 %v2227, %v2360
        %v2457 = vmul.f32 %v2231, %v2360
        %v2458 = vmul.f32 %v2235, %v2360
        %v2459 = vmul.f32 %v2239, %v2360
        %v2460 = vmul.f32 %v2243, %v2360
        %v2461 = vmul.f32 %v2247, %v2360
        %v2462 = vmul.f32 %v2251, %v2360
        %v2463 = vmul.f32 %v2255, %v2360
        %v2464 = vmul.f32 %v2259, %v2360
        %v2465 = vmul.f32 %v2263, %v2360
        %v2466 = vmul.f32 %v2267, %v2360
        %v2467 = vmul.f32 %v2271, %v2360
        %v2468 = vmul.f32 %v2275, %v2360
        %v2469 = vmul.f32 %v2279, %v2360
        %v2470 = vmul.f32 %v2283, %v2360
        %v2471 = vmul.f32 %v2287, %v2360
        %v2472 = vmul.f32 %v2291, %v2360
        %v2473 = vmul.f32 %v2295, %v2360
        %v2474 = vmul.f32 %v2299, %v2360
        %v2475 = vmul.f32 %v2303, %v2360
        %v2476 = vmul.f32 %v2307, %v2360
        %v2477 = vmul.f32 %v2311, %v2360
        %v2478 = vmul.f32 %v2315, %v2360
        %v2479 = vmul.f32 %v2319, %v2360
        %v2480 = vmul.f32 %v2323, %v2360
        %v2481 = vmul.f32 %v2327, %v2360
        %v2482 = vmul.f32 %v2331, %v2360
        %v2483 = vmul.f32 %v2335, %v2360
        %v2484 = vmul.f32 %v2339, %v2360
        %v2485 = vmul.f32 %v2343, %v2360
        %v2486 = vmul.f32 %v2347, %v2360
        %v2487 = vmul.f32 %v2351, %v2360
        %v2488 = vmul.f32 %v2355, %v2360
        %v2489 = vadd.f32 %v1717, %v2361
        %v2490 = vadd.f32 %v1718, %v2362
        %v2491 = vadd.f32 %v1719, %v2363
        %v2492 = vadd.f32 %v1720, %v2364
        %v2493 = vadd.f32 %v1721, %v2365
        %v2494 = vadd.f32 %v1722, %v2366
        %v2495 = vadd.f32 %v1723, %v2367
        %v2496 = vadd.f32 %v1724, %v2368
        %v2497 = vadd.f32 %v1725, %v2369
        %v2498 = vadd.f32 %v1726, %v2370
        %v2499 = vadd.f32 %v1727, %v2371
        %v2500 = vadd.f32 %v1728, %v2372
        %v2501 = vadd.f32 %v1729, %v2373
        %v2502 = vadd.f32 %v1730, %v2374
        %v2503 = vadd.f32 %v1731, %v2375
        %v2504 = vadd.f32 %v1732, %v2376
        %v2505 = vadd.f32 %v1733, %v2377
        %v2506 = vadd.f32 %v1734, %v2378
        %v2507 = vadd.f32 %v1735, %v2379
        %v2508 = vadd.f32 %v1736, %v2380
        %v2509 = vadd.f32 %v1737, %v2381
        %v2510 = vadd.f32 %v1738, %v2382
        %v2511 = vadd.f32 %v1739, %v2383
        %v2512 = vadd.f32 %v1740, %v2384
        %v2513 = vadd.f32 %v1741, %v2385
        %v2514 = vadd.f32 %v1742, %v2386
        %v2515 = vadd.f32 %v1743, %v2387
        %v2516 = vadd.f32 %v1744, %v2388
        %v2517 = vadd.f32 %v1745, %v2389
        %v2518 = vadd.f32 %v1746, %v2390
        %v2519 = vadd.f32 %v1747, %v2391
        %v2520 = vadd.f32 %v1748, %v2392
        %v2521 = vadd.f32 %v1749, %v2393
        %v2522 = vadd.f32 %v1750, %v2394
        %v2523 = vadd.f32 %v1751, %v2395
        %v2524 = vadd.f32 %v1752, %v2396
        %v2525 = vadd.f32 %v1753, %v2397
        %v2526 = vadd.f32 %v1754, %v2398
        %v2527 = vadd.f32 %v1755, %v2399
        %v2528 = vadd.f32 %v1756, %v2400
        %v2529 = vadd.f32 %v1757, %v2401
        %v2530 = vadd.f32 %v1758, %v2402
        %v2531 = vadd.f32 %v1759, %v2403
        %v2532 = vadd.f32 %v1760, %v2404
        %v2533 = vadd.f32 %v1761, %v2405
        %v2534 = vadd.f32 %v1762, %v2406
        %v2535 = vadd.f32 %v1763, %v2407
        %v2536 = vadd.f32 %v1764, %v2408
        %v2537 = vadd.f32 %v1765, %v2409
        %v2538 = vadd.f32 %v1766, %v2410
        %v2539 = vadd.f32 %v1767, %v2411
        %v2540 = vadd.f32 %v1768, %v2412
        %v2541 = vadd.f32 %v1769, %v2413
        %v2542 = vadd.f32 %v1770, %v2414
        %v2543 = vadd.f32 %v1771, %v2415
        %v2544 = vadd.f32 %v1772, %v2416
        %v2545 = vadd.f32 %v1773, %v2417
        %v2546 = vadd.f32 %v1774, %v2418
        %v2547 = vadd.f32 %v1775, %v2419
        %v2548 = vadd.f32 %v1776, %v2420
        %v2549 = vadd.f32 %v1777, %v2421
        %v2550 = vadd.f32 %v1778, %v2422
        %v2551 = vadd.f32 %v1779, %v2423
        %v2552 = vadd.f32 %v1780, %v2424
        %v2553 = vadd.f32 %v1781, %v2425
        %v2554 = vadd.f32 %v1782, %v2426
        %v2555 = vadd.f32 %v1783, %v2427
        %v2556 = vadd.f32 %v1784, %v2428
        %v2557 = vadd.f32 %v1785, %v2429
        %v2558 = vadd.f32 %v1786, %v2430
        %v2559 = vadd.f32 %v1787, %v2431
        %v2560 = vadd.f32 %v1788, %v2432
        %v2561 = vadd.f32 %v1789, %v2433
        %v2562 = vadd.f32 %v1790, %v2434
        %v2563 = vadd.f32 %v1791, %v2435
        %v2564 = vadd.f32 %v1792, %v2436
        %v2565 = vadd.f32 %v1793, %v2437
        %v2566 = vadd.f32 %v1794, %v2438
        %v2567 = vadd.f32 %v1795, %v2439
        %v2568 = vadd.f32 %v1796, %v2440
        %v2569 = vadd.f32 %v1797, %v2441
        %v2570 = vadd.f32 %v1798, %v2442
        %v2571 = vadd.f32 %v1799, %v2443
        %v2572 = vadd.f32 %v1800, %v2444
        %v2573 = vadd.f32 %v1801, %v2445
        %v2574 = vadd.f32 %v1802, %v2446
        %v2575 = vadd.f32 %v1803, %v2447
        %v2576 = vadd.f32 %v1804, %v2448
        %v2577 = vadd.f32 %v1805, %v2449
        %v2578 = vadd.f32 %v1806, %v2450
        %v2579 = vadd.f32 %v1807, %v2451
        %v2580 = vadd.f32 %v1808, %v2452
        %v2581 = vadd.f32 %v1809, %v2453
        %v2582 = vadd.f32 %v1810, %v2454
        %v2583 = vadd.f32 %v1811, %v2455
        %v2584 = vadd.f32 %v1812, %v2456
        %v2585 = vadd.f32 %v1813, %v2457
        %v2586 = vadd.f32 %v1814, %v2458
        %v2587 = vadd.f32 %v1815, %v2459
        %v2588 = vadd.f32 %v1816, %v2460
        %v2589 = vadd.f32 %v1817, %v2461
        %v2590 = vadd.f32 %v1818, %v2462
        %v2591 = vadd.f32 %v1819, %v2463
        %v2592 = vadd.f32 %v1820, %v2464
        %v2593 = vadd.f32 %v1821, %v2465
        %v2594 = vadd.f32 %v1822, %v2466
        %v2595 = vadd.f32 %v1823, %v2467
        %v2596 = vadd.f32 %v1824, %v2468
        %v2597 = vadd.f32 %v1825, %v2469
        %v2598 = vadd.f32 %v1826, %v2470
        %v2599 = vadd.f32 %v1827, %v2471
        %v2600 = vadd.f32 %v1828, %v2472
        %v2601 = vadd.f32 %v1829, %v2473
        %v2602 = vadd.f32 %v1830, %v2474
        %v2603 = vadd.f32 %v1831, %v2475
        %v2604 = vadd.f32 %v1832, %v2476
        %v2605 = vadd.f32 %v1833, %v2477
        %v2606 = vadd.f32 %v1834, %v2478
        %v2607 = vadd.f32 %v1835, %v2479
        %v2608 = vadd.f32 %v1836, %v2480
        %v2609 = vadd.f32 %v1837, %v2481
        %v2610 = vadd.f32 %v1838, %v2482
        %v2611 = vadd.f32 %v1839, %v2483
        %v2612 = vadd.f32 %v1840, %v2484
        %v2613 = vadd.f32 %v1841, %v2485
        %v2614 = vadd.f32 %v1842, %v2486
        %v2615 = vadd.f32 %v1843, %v2487
        %v2616 = vadd.f32 %v1844, %v2488
        %v2617 = vld [vmem:[%s2] sm:$0x1]
        %v2619 = vlaneseq
        %v2620 = vshrl.u32 %v2619, 7
        %v2621 = vsub.s32 0, %v2620
        %v2622 = vrot.slane %v2617, %v2621
        %v2624 = vadd.f32 %v2489, %v2622
        %v2625 = vadd.f32 %v2490, %v2622
        %v2626 = vadd.f32 %v2491, %v2622
        %v2627 = vadd.f32 %v2492, %v2622
        %v2628 = vadd.f32 %v2493, %v2622
        %v2629 = vadd.f32 %v2494, %v2622
        %v2630 = vadd.f32 %v2495, %v2622
        %v2631 = vadd.f32 %v2496, %v2622
        %v2632 = vadd.f32 %v2497, %v2622
        %v2633 = vadd.f32 %v2498, %v2622
        %v2634 = vadd.f32 %v2499, %v2622
        %v2635 = vadd.f32 %v2500, %v2622
        %v2636 = vadd.f32 %v2501, %v2622
        %v2637 = vadd.f32 %v2502, %v2622
        %v2638 = vadd.f32 %v2503, %v2622
        %v2639 = vadd.f32 %v2504, %v2622
        %v2640 = vadd.f32 %v2505, %v2622
        %v2641 = vadd.f32 %v2506, %v2622
        %v2642 = vadd.f32 %v2507, %v2622
        %v2643 = vadd.f32 %v2508, %v2622
        %v2644 = vadd.f32 %v2509, %v2622
        %v2645 = vadd.f32 %v2510, %v2622
        %v2646 = vadd.f32 %v2511, %v2622
        %v2647 = vadd.f32 %v2512, %v2622
        %v2648 = vadd.f32 %v2513, %v2622
        %v2649 = vadd.f32 %v2514, %v2622
        %v2650 = vadd.f32 %v2515, %v2622
        %v2651 = vadd.f32 %v2516, %v2622
        %v2652 = vadd.f32 %v2517, %v2622
        %v2653 = vadd.f32 %v2518, %v2622
        %v2654 = vadd.f32 %v2519, %v2622
        %v2655 = vadd.f32 %v2520, %v2622
        %v2656 = vadd.f32 %v2521, %v2622
        %v2657 = vadd.f32 %v2522, %v2622
        %v2658 = vadd.f32 %v2523, %v2622
        %v2659 = vadd.f32 %v2524, %v2622
        %v2660 = vadd.f32 %v2525, %v2622
        %v2661 = vadd.f32 %v2526, %v2622
        %v2662 = vadd.f32 %v2527, %v2622
        %v2663 = vadd.f32 %v2528, %v2622
        %v2664 = vadd.f32 %v2529, %v2622
        %v2665 = vadd.f32 %v2530, %v2622
        %v2666 = vadd.f32 %v2531, %v2622
        %v2667 = vadd.f32 %v2532, %v2622
        %v2668 = vadd.f32 %v2533, %v2622
        %v2669 = vadd.f32 %v2534, %v2622
        %v2670 = vadd.f32 %v2535, %v2622
        %v2671 = vadd.f32 %v2536, %v2622
        %v2672 = vadd.f32 %v2537, %v2622
        %v2673 = vadd.f32 %v2538, %v2622
        %v2674 = vadd.f32 %v2539, %v2622
        %v2675 = vadd.f32 %v2540, %v2622
        %v2676 = vadd.f32 %v2541, %v2622
        %v2677 = vadd.f32 %v2542, %v2622
        %v2678 = vadd.f32 %v2543, %v2622
        %v2679 = vadd.f32 %v2544, %v2622
        %v2680 = vadd.f32 %v2545, %v2622
        %v2681 = vadd.f32 %v2546, %v2622
        %v2682 = vadd.f32 %v2547, %v2622
        %v2683 = vadd.f32 %v2548, %v2622
        %v2684 = vadd.f32 %v2549, %v2622
        %v2685 = vadd.f32 %v2550, %v2622
        %v2686 = vadd.f32 %v2551, %v2622
        %v2687 = vadd.f32 %v2552, %v2622
        %v2688 = vadd.f32 %v2553, %v2622
        %v2689 = vadd.f32 %v2554, %v2622
        %v2690 = vadd.f32 %v2555, %v2622
        %v2691 = vadd.f32 %v2556, %v2622
        %v2692 = vadd.f32 %v2557, %v2622
        %v2693 = vadd.f32 %v2558, %v2622
        %v2694 = vadd.f32 %v2559, %v2622
        %v2695 = vadd.f32 %v2560, %v2622
        %v2696 = vadd.f32 %v2561, %v2622
        %v2697 = vadd.f32 %v2562, %v2622
        %v2698 = vadd.f32 %v2563, %v2622
        %v2699 = vadd.f32 %v2564, %v2622
        %v2700 = vadd.f32 %v2565, %v2622
        %v2701 = vadd.f32 %v2566, %v2622
        %v2702 = vadd.f32 %v2567, %v2622
        %v2703 = vadd.f32 %v2568, %v2622
        %v2704 = vadd.f32 %v2569, %v2622
        %v2705 = vadd.f32 %v2570, %v2622
        %v2706 = vadd.f32 %v2571, %v2622
        %v2707 = vadd.f32 %v2572, %v2622
        %v2708 = vadd.f32 %v2573, %v2622
        %v2709 = vadd.f32 %v2574, %v2622
        %v2710 = vadd.f32 %v2575, %v2622
        %v2711 = vadd.f32 %v2576, %v2622
        %v2712 = vadd.f32 %v2577, %v2622
        %v2713 = vadd.f32 %v2578, %v2622
        %v2714 = vadd.f32 %v2579, %v2622
        %v2715 = vadd.f32 %v2580, %v2622
        %v2716 = vadd.f32 %v2581, %v2622
        %v2717 = vadd.f32 %v2582, %v2622
        %v2718 = vadd.f32 %v2583, %v2622
        %v2719 = vadd.f32 %v2584, %v2622
        %v2720 = vadd.f32 %v2585, %v2622
        %v2721 = vadd.f32 %v2586, %v2622
        %v2722 = vadd.f32 %v2587, %v2622
        %v2723 = vadd.f32 %v2588, %v2622
        %v2724 = vadd.f32 %v2589, %v2622
        %v2725 = vadd.f32 %v2590, %v2622
        %v2726 = vadd.f32 %v2591, %v2622
        %v2727 = vadd.f32 %v2592, %v2622
        %v2728 = vadd.f32 %v2593, %v2622
        %v2729 = vadd.f32 %v2594, %v2622
        %v2730 = vadd.f32 %v2595, %v2622
        %v2731 = vadd.f32 %v2596, %v2622
        %v2732 = vadd.f32 %v2597, %v2622
        %v2733 = vadd.f32 %v2598, %v2622
        %v2734 = vadd.f32 %v2599, %v2622
        %v2735 = vadd.f32 %v2600, %v2622
        %v2736 = vadd.f32 %v2601, %v2622
        %v2737 = vadd.f32 %v2602, %v2622
        %v2738 = vadd.f32 %v2603, %v2622
        %v2739 = vadd.f32 %v2604, %v2622
        %v2740 = vadd.f32 %v2605, %v2622
        %v2741 = vadd.f32 %v2606, %v2622
        %v2742 = vadd.f32 %v2607, %v2622
        %v2743 = vadd.f32 %v2608, %v2622
        %v2744 = vadd.f32 %v2609, %v2622
        %v2745 = vadd.f32 %v2610, %v2622
        %v2746 = vadd.f32 %v2611, %v2622
        %v2747 = vadd.f32 %v2612, %v2622
        %v2748 = vadd.f32 %v2613, %v2622
        %v2749 = vadd.f32 %v2614, %v2622
        %v2750 = vadd.f32 %v2615, %v2622
        %v2751 = vadd.f32 %v2616, %v2622
        %2752 = vst [vmem:[%s164] sm:$0xff] %v2624
        %2753 = vst [vmem:[%s164 + $0x8] sm:$0xff] %v2625
        %2754 = vst [vmem:[%s164 + $0x10] sm:$0xff] %v2626
        %2755 = vst [vmem:[%s164 + $0x18] sm:$0xff] %v2627
        %2756 = vst [vmem:[%s164 + $0x20] sm:$0xff] %v2628
        %2757 = vst [vmem:[%s164 + $0x28] sm:$0xff] %v2629
        %2758 = vst [vmem:[%s164 + $0x30] sm:$0xff] %v2630
        %2759 = vst [vmem:[%s164 + $0x38] sm:$0xff] %v2631
        %2760 = vst [vmem:[%s164 + $0x40] sm:$0xff] %v2632
        %2761 = vst [vmem:[%s164 + $0x48] sm:$0xff] %v2633
        %2762 = vst [vmem:[%s164 + $0x50] sm:$0xff] %v2634
        %2763 = vst [vmem:[%s164 + $0x58] sm:$0xff] %v2635
        %2764 = vst [vmem:[%s164 + $0x60] sm:$0xff] %v2636
        %2765 = vst [vmem:[%s164 + $0x68] sm:$0xff] %v2637
        %2766 = vst [vmem:[%s164 + $0x70] sm:$0xff] %v2638
        %2767 = vst [vmem:[%s164 + $0x78] sm:$0xff] %v2639
        %2768 = vst [vmem:[%s164 + $0x80] sm:$0xff] %v2640
        %2769 = vst [vmem:[%s164 + $0x88] sm:$0xff] %v2641
        %2770 = vst [vmem:[%s164 + $0x90] sm:$0xff] %v2642
        %2771 = vst [vmem:[%s164 + $0x98] sm:$0xff] %v2643
        %2772 = vst [vmem:[%s164 + $0xa0] sm:$0xff] %v2644
        %2773 = vst [vmem:[%s164 + $0xa8] sm:$0xff] %v2645
        %2774 = vst [vmem:[%s164 + $0xb0] sm:$0xff] %v2646
        %2775 = vst [vmem:[%s164 + $0xb8] sm:$0xff] %v2647
        %2776 = vst [vmem:[%s164 + $0xc0] sm:$0xff] %v2648
        %2777 = vst [vmem:[%s164 + $0xc8] sm:$0xff] %v2649
        %2778 = vst [vmem:[%s164 + $0xd0] sm:$0xff] %v2650
        %2779 = vst [vmem:[%s164 + $0xd8] sm:$0xff] %v2651
        %2780 = vst [vmem:[%s164 + $0xe0] sm:$0xff] %v2652
        %2781 = vst [vmem:[%s164 + $0xe8] sm:$0xff] %v2653
        %2782 = vst [vmem:[%s164 + $0xf0] sm:$0xff] %v2654
        %2783 = vst [vmem:[%s164 + $0xf8] sm:$0xff] %v2655
        %2784 = vst [vmem:[%s164 + $0x100] sm:$0xff] %v2656
        %2785 = vst [vmem:[%s164 + $0x108] sm:$0xff] %v2657
        %2786 = vst [vmem:[%s164 + $0x110] sm:$0xff] %v2658
        %2787 = vst [vmem:[%s164 + $0x118] sm:$0xff] %v2659
        %2788 = vst [vmem:[%s164 + $0x120] sm:$0xff] %v2660
        %2789 = vst [vmem:[%s164 + $0x128] sm:$0xff] %v2661
        %2790 = vst [vmem:[%s164 + $0x130] sm:$0xff] %v2662
        %2791 = vst [vmem:[%s164 + $0x138] sm:$0xff] %v2663
        %2792 = vst [vmem:[%s164 + $0x140] sm:$0xff] %v2664
        %2793 = vst [vmem:[%s164 + $0x148] sm:$0xff] %v2665
        %2794 = vst [vmem:[%s164 + $0x150] sm:$0xff] %v2666
        %2795 = vst [vmem:[%s164 + $0x158] sm:$0xff] %v2667
        %2796 = vst [vmem:[%s164 + $0x160] sm:$0xff] %v2668
        %2797 = vst [vmem:[%s164 + $0x168] sm:$0xff] %v2669
        %2798 = vst [vmem:[%s164 + $0x170] sm:$0xff] %v2670
        %2799 = vst [vmem:[%s164 + $0x178] sm:$0xff] %v2671
        %2800 = vst [vmem:[%s164 + $0x180] sm:$0xff] %v2672
        %2801 = vst [vmem:[%s164 + $0x188] sm:$0xff] %v2673
        %2802 = vst [vmem:[%s164 + $0x190] sm:$0xff] %v2674
        %2803 = vst [vmem:[%s164 + $0x198] sm:$0xff] %v2675
        %2804 = vst [vmem:[%s164 + $0x1a0] sm:$0xff] %v2676
        %2805 = vst [vmem:[%s164 + $0x1a8] sm:$0xff] %v2677
        %2806 = vst [vmem:[%s164 + $0x1b0] sm:$0xff] %v2678
        %2807 = vst [vmem:[%s164 + $0x1b8] sm:$0xff] %v2679
        %2808 = vst [vmem:[%s164 + $0x1c0] sm:$0xff] %v2680
        %2809 = vst [vmem:[%s164 + $0x1c8] sm:$0xff] %v2681
        %2810 = vst [vmem:[%s164 + $0x1d0] sm:$0xff] %v2682
        %2811 = vst [vmem:[%s164 + $0x1d8] sm:$0xff] %v2683
        %2812 = vst [vmem:[%s164 + $0x1e0] sm:$0xff] %v2684
        %2813 = vst [vmem:[%s164 + $0x1e8] sm:$0xff] %v2685
        %2814 = vst [vmem:[%s164 + $0x1f0] sm:$0xff] %v2686
        %2815 = vst [vmem:[%s164 + $0x1f8] sm:$0xff] %v2687
        %2816 = vst [vmem:[%s164 + $0x200] sm:$0xff] %v2688
        %2817 = vst [vmem:[%s164 + $0x208] sm:$0xff] %v2689
        %2818 = vst [vmem:[%s164 + $0x210] sm:$0xff] %v2690
        %2819 = vst [vmem:[%s164 + $0x218] sm:$0xff] %v2691
        %2820 = vst [vmem:[%s164 + $0x220] sm:$0xff] %v2692
        %2821 = vst [vmem:[%s164 + $0x228] sm:$0xff] %v2693
        %2822 = vst [vmem:[%s164 + $0x230] sm:$0xff] %v2694
        %2823 = vst [vmem:[%s164 + $0x238] sm:$0xff] %v2695
        %2824 = vst [vmem:[%s164 + $0x240] sm:$0xff] %v2696
        %2825 = vst [vmem:[%s164 + $0x248] sm:$0xff] %v2697
        %2826 = vst [vmem:[%s164 + $0x250] sm:$0xff] %v2698
        %2827 = vst [vmem:[%s164 + $0x258] sm:$0xff] %v2699
        %2828 = vst [vmem:[%s164 + $0x260] sm:$0xff] %v2700
        %2829 = vst [vmem:[%s164 + $0x268] sm:$0xff] %v2701
        %2830 = vst [vmem:[%s164 + $0x270] sm:$0xff] %v2702
        %2831 = vst [vmem:[%s164 + $0x278] sm:$0xff] %v2703
        %2832 = vst [vmem:[%s164 + $0x280] sm:$0xff] %v2704
        %2833 = vst [vmem:[%s164 + $0x288] sm:$0xff] %v2705
        %2834 = vst [vmem:[%s164 + $0x290] sm:$0xff] %v2706
        %2835 = vst [vmem:[%s164 + $0x298] sm:$0xff] %v2707
        %2836 = vst [vmem:[%s164 + $0x2a0] sm:$0xff] %v2708
        %2837 = vst [vmem:[%s164 + $0x2a8] sm:$0xff] %v2709
        %2838 = vst [vmem:[%s164 + $0x2b0] sm:$0xff] %v2710
        %2839 = vst [vmem:[%s164 + $0x2b8] sm:$0xff] %v2711
        %2840 = vst [vmem:[%s164 + $0x2c0] sm:$0xff] %v2712
        %2841 = vst [vmem:[%s164 + $0x2c8] sm:$0xff] %v2713
        %2842 = vst [vmem:[%s164 + $0x2d0] sm:$0xff] %v2714
        %2843 = vst [vmem:[%s164 + $0x2d8] sm:$0xff] %v2715
        %2844 = vst [vmem:[%s164 + $0x2e0] sm:$0xff] %v2716
        %2845 = vst [vmem:[%s164 + $0x2e8] sm:$0xff] %v2717
        %2846 = vst [vmem:[%s164 + $0x2f0] sm:$0xff] %v2718
        %2847 = vst [vmem:[%s164 + $0x2f8] sm:$0xff] %v2719
        %2848 = vst [vmem:[%s164 + $0x300] sm:$0xff] %v2720
        %2849 = vst [vmem:[%s164 + $0x308] sm:$0xff] %v2721
        %2850 = vst [vmem:[%s164 + $0x310] sm:$0xff] %v2722
        %2851 = vst [vmem:[%s164 + $0x318] sm:$0xff] %v2723
        %2852 = vst [vmem:[%s164 + $0x320] sm:$0xff] %v2724
        %2853 = vst [vmem:[%s164 + $0x328] sm:$0xff] %v2725
        %2854 = vst [vmem:[%s164 + $0x330] sm:$0xff] %v2726
        %2855 = vst [vmem:[%s164 + $0x338] sm:$0xff] %v2727
        %2856 = vst [vmem:[%s164 + $0x340] sm:$0xff] %v2728
        %2857 = vst [vmem:[%s164 + $0x348] sm:$0xff] %v2729
        %2858 = vst [vmem:[%s164 + $0x350] sm:$0xff] %v2730
        %2859 = vst [vmem:[%s164 + $0x358] sm:$0xff] %v2731
        %2860 = vst [vmem:[%s164 + $0x360] sm:$0xff] %v2732
        %2861 = vst [vmem:[%s164 + $0x368] sm:$0xff] %v2733
        %2862 = vst [vmem:[%s164 + $0x370] sm:$0xff] %v2734
        %2863 = vst [vmem:[%s164 + $0x378] sm:$0xff] %v2735
        %2864 = vst [vmem:[%s164 + $0x380] sm:$0xff] %v2736
        %2865 = vst [vmem:[%s164 + $0x388] sm:$0xff] %v2737
        %2866 = vst [vmem:[%s164 + $0x390] sm:$0xff] %v2738
        %2867 = vst [vmem:[%s164 + $0x398] sm:$0xff] %v2739
        %2868 = vst [vmem:[%s164 + $0x3a0] sm:$0xff] %v2740
        %2869 = vst [vmem:[%s164 + $0x3a8] sm:$0xff] %v2741
        %2870 = vst [vmem:[%s164 + $0x3b0] sm:$0xff] %v2742
        %2871 = vst [vmem:[%s164 + $0x3b8] sm:$0xff] %v2743
        %2872 = vst [vmem:[%s164 + $0x3c0] sm:$0xff] %v2744
        %2873 = vst [vmem:[%s164 + $0x3c8] sm:$0xff] %v2745
        %2874 = vst [vmem:[%s164 + $0x3d0] sm:$0xff] %v2746
        %2875 = vst [vmem:[%s164 + $0x3d8] sm:$0xff] %v2747
        %2876 = vst [vmem:[%s164 + $0x3e0] sm:$0xff] %v2748
        %2877 = vst [vmem:[%s164 + $0x3e8] sm:$0xff] %v2749
        %2878 = vst [vmem:[%s164 + $0x3f0] sm:$0xff] %v2750
        %2879 = vst [vmem:[%s164 + $0x3f8] sm:$0xff] %v2751
        %s2880 = sand.u32 %s93, 1
        %s2881 = scalar_lea.sflag [#allocation3], %s2880
        %s2882 = sand.u32 %s93, 1
        %s2883 = smul.addr %s2882, 1024
        %s2884 = scalar_lea.vmem [#allocation2], %s2883
        // Predicated region
        $region33: #{tpu_custom_call.1} parent=31 // pred_check
          %p2885 = pneg %p103
        $region34: #{tpu_custom_call.1} parent=31 // pred_check_branch
          %2887 = sbr.rel (%p2885) target = $region36
        $region35: #{tpu_custom_call.1} parent=31 // pred_region
          %s2888 = smul.u32 128, %s17
          %s2890 = ssub.s32 16384, 16384
          %2891 = vsyncadd %s2881, %s2890
          %s2892 = smul.addr %s2888, 128
          %s2893 = scalar_lea.hbm %s3, %s2892
          %s2894 = sshll.u32 %s2884, 4
          %s2895 = int_to_ptr.vmem [resolvable:$true] %s2894
          %2900 = dma.vmem_to_hbm [thread:$0]  %s2895, 16384, %s2893, %s2881, 128, 128, 8
        $region36: #{tpu_custom_call.1} parent=31 // pred_fallthru
          _
      $region32: #{tpu_custom_call.1} parent=5 // pred_fallthru
        _
      %p2901 = scmp.le.s32.totalorder 2, %s12
      // Predicated region
      $region37: #{tpu_custom_call.1} parent=5 // pred_check
        %p2902 = pneg %p2901
      $region38: #{tpu_custom_call.1} parent=5 // pred_check_branch
        %2904 = sbr.rel (%p2902) target = $region40
      $region39: #{tpu_custom_call.1} parent=5 // pred_region
        %s2905 = ssub.s32 %s12, 2
        // Predicated region
        $region41: #{tpu_custom_call.1} parent=39 // pred_check
          %p2906 = pneg %p109
        $region42: #{tpu_custom_call.1} parent=39 // pred_check_branch
          %2908 = sbr.rel (%p2906) target = $region44
        $region43: #{tpu_custom_call.1} parent=39 // pred_region
          %s2909 = sand.u32 %s94, 1
          %s2910 = scalar_lea.sflag [#allocation3], %s2909
          %s2911 = sand.u32 %s94, 1
          %s2912 = smul.addr %s2911, 1024
          %s2913 = scalar_lea.vmem [#allocation2], %s2912
          %2914 = dma.done %s2910, 16384
        $region44: #{tpu_custom_call.1} parent=39 // pred_fallthru
          _
      $region40: #{tpu_custom_call.1} parent=5 // pred_fallthru
        _
    $region6: #{tpu_custom_call.1} parent=1 // loop_footer
      %s16 = sadd.s32 1, %s12
    $region7: #{tpu_custom_call.1} parent=1 // loop_footer_branch
      %11 = sbr.rel target = $region3
    $region8: #{tpu_custom_call.1} parent=1 // loop_exit
      _
    %2915 = vsyncpa [#allocation3], 1
    %s2916 = scalar_lea.sflag [#allocation3], 1
    %2917 = vsyncpa %s2916, 1

</llo_original>
